<compile_context>
chip_gen: v5e
topology: v5e:2x2
jax: 0.10.0
libtpu: 0.0.40
codegen_flags: <defaults>
</compile_context>

<pallas_src>
import functools
import math

import jax
import jax.numpy as jnp
from jax.experimental import pallas as pl
from jax.experimental.pallas import tpu as pltpu

_BN_EPS = 1e-5


def _round_up(x, m):
    return (x + m - 1) // m * m


def _pick_divisor_tile(padded_dim, candidates):
    for c in candidates:
        if padded_dim % c == 0:
            return c
    return candidates[-1]


def _pick_m_tile(m):
    # Largest tile whose padding wastes <= 12.5% of rows (padded rows are real
    # MXU FLOPs + DMA + writeback).
    for tm in (512, 256, 128, 64, 32, 16):
        mp = _round_up(m, tm)
        if mp - m <= 0.125 * m:
            return tm, mp
    return 16, _round_up(m, 16)


def _pick_scored_tile(dim, candidates, step_penalty=128):
    # Trade total padded extent (zero-FLOP work / DMA) against grid-step count
    # (pipeline overhead, operand re-reads).  `dim` must be >= 128.
    best = None
    for t in candidates:
        dp = _round_up(dim, t)
        score = dp + step_penalty * (dp // t)
        if best is None or score < best[0]:
            best = (score, t, dp)
    return best[1], best[2]


# --------------------------------------------------------------------------
# Pallas kernels
# --------------------------------------------------------------------------
def _gemm_bias_kernel(a_ref, b_ref, bias_ref, o_ref, acc_ref, *, relu):
    k = pl.program_id(2)

    @pl.when(k == 0)
    def _():
        acc_ref[...] = jnp.zeros_like(acc_ref)

    acc_ref[...] += jnp.dot(a_ref[...], b_ref[...],
                            preferred_element_type=jnp.float32)

    @pl.when(k == pl.num_programs(2) - 1)
    def _():
        y = acc_ref[...] + bias_ref[...]
        if relu:
            y = jnp.maximum(y, 0.0)
        o_ref[...] = y.astype(o_ref.dtype)


def _gemm_bias_res_relu_kernel(a_ref, b_ref, bias_ref, r_ref, o_ref, acc_ref):
    k = pl.program_id(2)

    @pl.when(k == 0)
    def _():
        acc_ref[...] = jnp.zeros_like(acc_ref)

    acc_ref[...] += jnp.dot(a_ref[...], b_ref[...],
                            preferred_element_type=jnp.float32)

    @pl.when(k == pl.num_programs(2) - 1)
    def _():
        y = acc_ref[...] + bias_ref[...] + r_ref[...].astype(jnp.float32)
        o_ref[...] = jnp.maximum(y, 0.0).astype(o_ref.dtype)


def _max9_kernel(*refs):
    # 9 input refs + 1 output ref, all (tm, tl) tiles: elementwise max.
    o_ref = refs[-1]
    m = refs[0][...]
    for r in refs[1:-1]:
        m = jnp.maximum(m, r[...])
    o_ref[...] = m


# --------------------------------------------------------------------------
# Tiled GEMM + fused bias / residual / ReLU
# --------------------------------------------------------------------------
def _pallas_gemm_bias(a, b, bias, residual=None, relu=True):
    """a: (M, K) bf16, b: (K, N) f32/bf16 (BN scale folded), bias: (N,) f32.

    Returns (M, N) bf16; accumulation and epilogue math in f32.
    """
    M, K = a.shape
    _, N = b.shape

    tm, Mp = _pick_m_tile(M)
    tn, Np = _pick_scored_tile(max(N, 128), (512, 384, 256, 128))
    tk, Kp = _pick_scored_tile(max(K, 128), (512, 384, 256, 128))
    # Keep at least two parallel blocks where possible (v7x has 2 TensorCores).
    if Mp // tm == 1 and Np // tn == 1 and tn in (512, 256):
        tn //= 2

    a_p = jnp.pad(a.astype(jnp.bfloat16), ((0, Mp - M), (0, Kp - K)))
    b_p = jnp.pad(b.astype(jnp.bfloat16), ((0, Kp - K), (0, Np - N)))
    bias_p = jnp.pad(bias.reshape(1, N).astype(jnp.float32),
                     ((0, 0), (0, Np - N)))

    gi, gj, gk = Mp // tm, Np // tn, Kp // tk

    args = [a_p, b_p, bias_p]
    in_specs = [
        pl.BlockSpec((tm, tk), lambda i, j, k: (i, k)),
        pl.BlockSpec((tk, tn), lambda i, j, k: (k, j)),
        pl.BlockSpec((1, tn), lambda i, j, k: (0, j)),
    ]
    # A re-read per j block, B re-read per i block, bf16 output written once.
    bytes_accessed = (a_p.size * 2 * gj + b_p.size * 2 * gi
                      + Mp * Np * 2 + bias_p.size * 4 * gi)
    if residual is not None:
        r_p = jnp.pad(residual.astype(jnp.bfloat16),
                      ((0, Mp - M), (0, Np - N)))
        args.append(r_p)
        in_specs.append(pl.BlockSpec((tm, tn), lambda i, j, k: (i, j)))
        bytes_accessed += Mp * Np * 2
        kernel = _gemm_bias_res_relu_kernel
    else:
        kernel = functools.partial(_gemm_bias_kernel, relu=relu)

    out = pl.pallas_call(
        kernel,
        out_shape=jax.ShapeDtypeStruct((Mp, Np), jnp.bfloat16),
        grid_spec=pltpu.PrefetchScalarGridSpec(
            num_scalar_prefetch=0,
            grid=(gi, gj, gk),
            in_specs=in_specs,
            out_specs=pl.BlockSpec((tm, tn), lambda i, j, k: (i, j)),
            scratch_shapes=[pltpu.VMEM((tm, tn), jnp.float32)],
        ),
        compiler_params=pltpu.CompilerParams(
            dimension_semantics=("parallel", "parallel", "arbitrary"),
            vmem_limit_bytes=32 * 1024 * 1024),
        cost_estimate=pl.CostEstimate(
            flops=int(2 * Mp * Np * Kp),
            transcendentals=0,
            bytes_accessed=int(bytes_accessed)),
    )(*args)
    return out[:M, :N]


# --------------------------------------------------------------------------
# Conv / pool wrappers (im2col glue in plain JAX, compute in Pallas)
# --------------------------------------------------------------------------
def _im2col(x, kh, kw, stride, dilation, padding):
    """x: (N, H, W, C) -> patches (N*OH*OW, kh*kw*C) in (kh, kw, c) order."""
    n, h, w, c = x.shape
    if kh == 1 and kw == 1 and padding == 0 and dilation == 1 and stride == 1:
        return x.reshape(n * h * w, c), (n, h, w)
    xp = jnp.pad(x, ((0, 0), (padding, padding), (padding, padding), (0, 0)))
    hp, wp = h + 2 * padding, w + 2 * padding
    oh = (hp - (dilation * (kh - 1) + 1)) // stride + 1
    ow = (wp - (dilation * (kw - 1) + 1)) // stride + 1
    cols = []
    for i in range(kh):
        for j in range(kw):
            hi, wj = i * dilation, j * dilation
            patch = jax.lax.slice(
                xp,
                (0, hi, wj, 0),
                (n, hi + stride * (oh - 1) + 1, wj + stride * (ow - 1) + 1, c),
                (1, stride, stride, 1),
            )
            cols.append(patch)
    patches = jnp.concatenate(cols, axis=-1)  # (N, OH, OW, kh*kw*C) bf16
    return patches.reshape(n * oh * ow, kh * kw * c), (n, oh, ow)


def conv_bn(x, w, bn, *, stride, dilation, padding, relu=True, residual=None):
    """x: NHWC bf16, w: (Cout, Cin, kh, kw) f32 [PyTorch layout]. Returns NHWC bf16."""
    cout, cin, kh, kw = w.shape
    a, (n, oh, ow) = _im2col(x.astype(jnp.bfloat16), kh, kw, stride, dilation,
                             padding)
    scale = bn["gamma"] / jnp.sqrt(bn["var"] + _BN_EPS)
    bias = bn["beta"] - bn["mean"] * scale
    # Fold BN scale into the weight matrix on the host (kernel adds bias only).
    b = (jnp.transpose(w, (2, 3, 1, 0)).reshape(kh * kw * cin, cout)
         * scale[None, :])
    res = None if residual is None else residual.reshape(n * oh * ow, cout)
    out = _pallas_gemm_bias(a, b, bias, residual=res, relu=relu)
    return out.reshape(n, oh, ow, cout)


def maxpool_3x3_s2_p1(x):
    """x: NHWC bf16, 3x3 max-pool, stride 2, pad 1 (pad value -inf, as PyTorch)."""
    n, h, w, c = x.shape
    xp = jnp.pad(x, ((0, 0), (1, 1), (1, 1), (0, 0)),
                 constant_values=-jnp.inf)
    oh = (h + 2 - 3) // 2 + 1
    ow = (w + 2 - 3) // 2 + 1
    taps = []
    for i in range(3):
        for j in range(3):
            t = jax.lax.slice(
                xp,
                (0, i, j, 0),
                (n, i + 2 * (oh - 1) + 1, j + 2 * (ow - 1) + 1, c),
                (1, 2, 2, 1),
            )
            # lane-dense layout: rows = N*OH, lanes = OW*C
            taps.append(t.reshape(n * oh, ow * c))

    M, L = n * oh, ow * c
    tm = 128 if M >= 128 else _round_up(M, 16)
    Mp = _round_up(M, tm)
    Lp = _round_up(L, 128)
    tl = _pick_divisor_tile(Lp, (1024, 512, 256, 128))
    if Mp != M or Lp != L:
        taps = [jnp.pad(t, ((0, Mp - M), (0, Lp - L)),
                        constant_values=-jnp.inf) for t in taps]

    spec = pl.BlockSpec((tm, tl), lambda i, j: (i, j))
    out = pl.pallas_call(
        _max9_kernel,
        out_shape=jax.ShapeDtypeStruct((Mp, Lp), x.dtype),
        grid_spec=pltpu.PrefetchScalarGridSpec(
            num_scalar_prefetch=0,
            grid=(Mp // tm, Lp // tl),
            in_specs=[spec] * 9,
            out_specs=spec,
        ),
        compiler_params=pltpu.CompilerParams(
            dimension_semantics=("parallel", "parallel"),
            vmem_limit_bytes=32 * 1024 * 1024),
    )(*taps)
    return out[:M, :L].reshape(n, oh, ow, c)


# --------------------------------------------------------------------------
# Parameter construction (deterministic, mirrors PyTorch __init__/_init_weight)
# --------------------------------------------------------------------------
class _KeyGen:
    def __init__(self, key):
        self._key = key
        self._i = 0

    def __call__(self):
        self._i += 1
        return jax.random.fold_in(self._key, self._i)


def _conv_weight(kg, cout, cin, kh, kw):
    # nn.Conv2d init in _init_weight: N(0, sqrt(2 / (kh*kw*cout)))
    std = math.sqrt(2.0 / (kh * kw * cout))
    return std * jax.random.normal(kg(), (cout, cin, kh, kw), jnp.float32)


def _bn_params(c):
    return {
        "gamma": jnp.ones((c,), jnp.float32),
        "beta": jnp.zeros((c,), jnp.float32),
        "mean": jnp.zeros((c,), jnp.float32),
        "var": jnp.ones((c,), jnp.float32),
    }


_EXPANSION = 4  # Bottleneck block


def _bottleneck_params(kg, inplanes, planes, has_downsample):
    p = {
        "conv1": _conv_weight(kg, planes, inplanes, 1, 1),
        "bn1": _bn_params(planes),
        "conv2": _conv_weight(kg, planes, planes, 3, 3),
        "bn2": _bn_params(planes),
        "conv3": _conv_weight(kg, planes * _EXPANSION, planes, 1, 1),
        "bn3": _bn_params(planes * _EXPANSION),
    }
    if has_downsample:
        p["ds_conv"] = _conv_weight(kg, planes * _EXPANSION, inplanes, 1, 1)
        p["ds_bn"] = _bn_params(planes * _EXPANSION)
    return p


def _bottleneck_forward(x, p, stride, dilation):
    out = conv_bn(x, p["conv1"], p["bn1"], stride=1, dilation=1, padding=0,
                  relu=True)
    out = conv_bn(out, p["conv2"], p["bn2"], stride=stride, dilation=dilation,
                  padding=dilation, relu=True)
    if "ds_conv" in p:
        identity = conv_bn(x, p["ds_conv"], p["ds_bn"], stride=stride,
                           dilation=1, padding=0, relu=False)
    else:
        identity = x
    # conv3 + bn3 + residual add + relu, fused into the GEMM epilogue
    out = conv_bn(out, p["conv3"], p["bn3"], stride=1, dilation=1, padding=0,
                  relu=True, residual=identity)
    return out


# --------------------------------------------------------------------------
# ResNet backbone
# --------------------------------------------------------------------------
class ResNetPallas:
    def __init__(self, layers, output_stride, key):
        blocks_mg = [1, 2, 4]
        if output_stride == 16:
            strides = [1, 2, 2, 1]
            dilations = [1, 1, 1, 2]
        elif output_stride == 8:
            strides = [1, 2, 1, 1]
            dilations = [1, 1, 2, 4]
        else:
            raise NotImplementedError

        kg = _KeyGen(key)
        self.inplanes = 64
        self.conv1_w = _conv_weight(kg, 64, 5, 7, 7)
        self.bn1 = _bn_params(64)

        self.layer1 = self._make_layer(kg, 64, layers[0], strides[0], dilations[0])
        self.layer2 = self._make_layer(kg, 128, layers[1], strides[1], dilations[1])
        self.layer3 = self._make_layer(kg, 256, layers[2], strides[2], dilations[2])
        self.layer4 = self._make_mg_unit(kg, 512, blocks_mg, strides[3], dilations[3])

    def _make_layer(self, kg, planes, blocks, stride, dilation):
        layer = []
        has_ds = stride != 1 or self.inplanes != planes * _EXPANSION
        layer.append((_bottleneck_params(kg, self.inplanes, planes, has_ds),
                      stride, dilation))
        self.inplanes = planes * _EXPANSION
        for _ in range(1, blocks):
            layer.append((_bottleneck_params(kg, self.inplanes, planes, False),
                          1, dilation))
        return layer

    def _make_mg_unit(self, kg, planes, blocks, stride, dilation):
        layer = []
        has_ds = stride != 1 or self.inplanes != planes * _EXPANSION
        layer.append((_bottleneck_params(kg, self.inplanes, planes, has_ds),
                      stride, blocks[0] * dilation))
        self.inplanes = planes * _EXPANSION
        for i in range(1, len(blocks)):
            layer.append((_bottleneck_params(kg, self.inplanes, planes, False),
                          1, blocks[i] * dilation))
        return layer

    @staticmethod
    def _run_layer(x, layer):
        for params, stride, dilation in layer:
            x = _bottleneck_forward(x, params, stride, dilation)
        return x

    def forward(self, x_nchw):
        # NCHW f32 (PyTorch boundary) -> NHWC bf16 (internal)
        x = jnp.transpose(x_nchw, (0, 2, 3, 1)).astype(jnp.bfloat16)
        x = conv_bn(x, self.conv1_w, self.bn1, stride=2, dilation=1, padding=3,
                    relu=True)
        x = maxpool_3x3_s2_p1(x)
        x = self._run_layer(x, self.layer1)
        low_level_feat = x
        x2 = self._run_layer(x, self.layer2)
        x3 = self._run_layer(x2, self.layer3)
        x4 = self._run_layer(x3, self.layer4)
        to_nchw = lambda t: jnp.transpose(t, (0, 3, 1, 2)).astype(jnp.float32)
        return (to_nchw(x4), to_nchw(x3), to_nchw(x2), to_nchw(low_level_feat))


# --------------------------------------------------------------------------
if __name__ == "__main__":
    key = jax.random.PRNGKey(0)
    # conv1 expects 5 input channels (RGB + 2 extra planes, as in the module)
    x = jax.random.normal(jax.random.fold_in(key, 12345), (2, 5, 32, 32), jnp.float32)

    # small, synthetic config: Bottleneck blocks, layers=(1,1,1), output_stride=16
    model = ResNetPallas(layers=(1, 1, 1), output_stride=16, key=key)

    outs = model.forward(x)
    outs = jax.block_until_ready(outs)

    x4, x3, x2, low = outs
    assert x4.shape == (2, 2048, 2, 2), x4.shape
    assert x3.shape == (2, 1024, 2, 2), x3.shape
    assert x2.shape == (2, 512, 4, 4), x2.shape
    assert low.shape == (2, 256, 8, 8), low.shape
    assert all(bool(jnp.all(jnp.isfinite(o))) for o in outs)

    print("KERNEL_OK")
</pallas_src>

<mosaic_0001>
module attributes {stable_mosaic.version = 11 : i64} {
  func.func @_gemm_bias_kernel(%arg0: i32, %arg1: i32, %arg2: i32, %arg3: memref<512x256xbf16, #tpu.memory_space<vmem>>, %arg4: memref<256x128xbf16, #tpu.memory_space<vmem>>, %arg5: memref<1x128xf32, #tpu.memory_space<vmem>>, %arg6: memref<512x128xbf16, #tpu.memory_space<vmem>>, %arg7: memref<512x128xf32, #tpu.memory_space<vmem>>) attributes {dimension_semantics = [#tpu.dimension_semantics<parallel>, #tpu.dimension_semantics<parallel>, #tpu.dimension_semantics<arbitrary>], iteration_bounds = array<i64: 1, 1, 1>, scalar_prefetch = 0 : i64, scratch_operands = 1 : i64, tpu.core_type = #tpu.core_type<tc>, window_params = [{transform_indices = @transform_0, window_bounds = array<i64: 512, 256>}, {transform_indices = @transform_1, window_bounds = array<i64: 256, 128>}, {transform_indices = @transform_2, window_bounds = array<i64: 1, 128>}, {transform_indices = @transform_3, window_bounds = array<i64: 512, 128>}]} {
    %c0_i32 = arith.constant 0 : i32
    %0 = arith.cmpi eq, %arg2, %c0_i32 : i32
    %1 = arith.extui %0 : i1 to i32
    %c0_i32_0 = arith.constant 0 : i32
    %2 = arith.cmpi ne, %1, %c0_i32_0 : i32
    scf.if %2 {
      %cst_10 = arith.constant 0.000000e+00 : f32
      %12 = vector.broadcast %cst_10 : f32 to vector<512x128xf32>
      %c0_11 = arith.constant 0 : index
      %c0_12 = arith.constant 0 : index
      %13 = vector.load %arg7[%c0_11, %c0_12] : memref<512x128xf32, #tpu.memory_space<vmem>>, vector<512x128xf32>
      tpu.vector_store %arg7[%c0_11, %c0_12], %12 {strides = array<i32>} : memref<512x128xf32, #tpu.memory_space<vmem>>, vector<512x128xf32>,
    } else {
    }
    %c0 = arith.constant 0 : index
    %c0_1 = arith.constant 0 : index
    %3 = vector.load %arg7[%c0, %c0_1] : memref<512x128xf32, #tpu.memory_space<vmem>>, vector<512x128xf32>
    %c0_2 = arith.constant 0 : index
    %c0_3 = arith.constant 0 : index
    %4 = vector.load %arg3[%c0_2, %c0_3] : memref<512x256xbf16, #tpu.memory_space<vmem>>, vector<512x256xbf16>
    %c0_4 = arith.constant 0 : index
    %c0_5 = arith.constant 0 : index
    %5 = vector.load %arg4[%c0_4, %c0_5] : memref<256x128xbf16, #tpu.memory_space<vmem>>, vector<256x128xbf16>
    %cst = arith.constant dense<0.000000e+00> : vector<512x128xf32>
    %6 = tpu.matmul %4, %5, %cst {dimension_numbers = #tpu.dot_dimension_numbers<[1], [0], [0], [1], [0, 0, 1, 1], [], []>} : vector<512x256xbf16>, vector<256x128xbf16>, vector<512x128xf32> -> vector<512x128xf32>
    %7 = arith.addf %3, %6 : vector<512x128xf32>
    %c0_6 = arith.constant 0 : index
    %c0_7 = arith.constant 0 : index
    %8 = vector.load %arg7[%c0_6, %c0_7] : memref<512x128xf32, #tpu.memory_space<vmem>>, vector<512x128xf32>
    tpu.vector_store %arg7[%c0_6, %c0_7], %7 {strides = array<i32>} : memref<512x128xf32, #tpu.memory_space<vmem>>, vector<512x128xf32>,
    %c0_i32_8 = arith.constant 0 : i32
    %9 = arith.cmpi eq, %arg2, %c0_i32_8 : i32
    %10 = arith.extui %9 : i1 to i32
    %c0_i32_9 = arith.constant 0 : i32
    %11 = arith.cmpi ne, %10, %c0_i32_9 : i32
    scf.if %11 {
      %c0_10 = arith.constant 0 : index
      %c0_11 = arith.constant 0 : index
      %12 = vector.load %arg7[%c0_10, %c0_11] : memref<512x128xf32, #tpu.memory_space<vmem>>, vector<512x128xf32>
      %c0_12 = arith.constant 0 : index
      %c0_13 = arith.constant 0 : index
      %13 = vector.load %arg5[%c0_12, %c0_13] : memref<1x128xf32, #tpu.memory_space<vmem>>, vector<1x128xf32>
      %14 = vector.broadcast %13 : vector<1x128xf32> to vector<512x128xf32>
      %15 = arith.addf %12, %14 : vector<512x128xf32>
      %cst_14 = arith.constant 0.000000e+00 : f32
      %16 = vector.broadcast %cst_14 : f32 to vector<512x128xf32>
      %17 = arith.maximumf %15, %16 : vector<512x128xf32>
      %18 = arith.truncf %17 : vector<512x128xf32> to vector<512x128xbf16>
      %c0_15 = arith.constant 0 : index
      %c0_16 = arith.constant 0 : index
      %19 = vector.load %arg6[%c0_15, %c0_16] : memref<512x128xbf16, #tpu.memory_space<vmem>>, vector<512x128xbf16>
      tpu.vector_store %arg6[%c0_15, %c0_16], %18 {strides = array<i32>} : memref<512x128xbf16, #tpu.memory_space<vmem>>, vector<512x128xbf16>,
    } else {
    }
    return
  }
  func.func @transform_0(%arg0: i32, %arg1: i32, %arg2: i32) -> (i32, i32) {
    %c0_i32 = arith.constant 0 : i32
    return %arg0, %arg2 : i32, i32
  }
  func.func @transform_1(%arg0: i32, %arg1: i32, %arg2: i32) -> (i32, i32) {
    %c0_i32 = arith.constant 0 : i32
    return %arg2, %arg1 : i32, i32
  }
  func.func @transform_2(%arg0: i32, %arg1: i32, %arg2: i32) -> (i32, i32) {
    %c0_i32 = arith.constant 0 : i32
    %c0_i32_0 = arith.constant 0 : i32
    return %c0_i32, %arg1 : i32, i32
  }
  func.func @transform_3(%arg0: i32, %arg1: i32, %arg2: i32) -> (i32, i32) {
    %c0_i32 = arith.constant 0 : i32
    return %arg0, %arg1 : i32, i32
  }
}

</mosaic_0001>

<llo_original>
// kernel: tpu_custom_call.1
$region0: #{tpu_custom_call.1}
  #allocation0 [shape = 'u32[]', space=smem, size = 0x4, offset = 0x4, fixed_abs, tag = 'smem constant byte address 0x4 - core index']
  #allocation1 [shape = 'u32[72,128]{1,0:T(1,128)}', space=vmem, size = 0x9000, scoped, tag = 'internal scratch']
  #allocation2 [shape = 'f32[512,128]{1,0:T(8,128)}', space=vmem, size = 0x40000, scoped, tag = 'scratch operand']
  %s0 = inlined_call_operand.hbm [shape: bf16[512,256], index: 0, kind: input, shape index: {}]
  %s1 = inlined_call_operand.hbm [shape: bf16[256,128], index: 1, kind: input, shape index: {}]
  %s2 = inlined_call_operand.vmem [shape: f32[1,128], index: 2, kind: input, shape index: {}]
  %s3 = inlined_call_operand.hbm [shape: bf16[512,128], index: 3, kind: output, shape index: {}]
  %s4 = sld [smem:[#allocation0]]
  $region38: #{tpu_custom_call.1} parent=0
    _
  %s6 = ssub.s32 1, %s4
  %s7 = scalar_select 0, %s6, %s4
  $region1: #{tpu_custom_call.1} parent=0
    #allocation3 [shape = 'u8[262144]{0}', space=vmem, size = 0x40000, scoped, tag = 'input window, operand 0, single buffered']
    #allocation4 [shape = 's32[1]{0}', space=sflag, size = 0x4, scoped, tag = 'scoped memory for tpu_custom_call.1']
    #allocation5 [shape = 's32[1]{0}', space=sflag, size = 0x4, scoped, tag = 'scoped memory for tpu_custom_call.1']
    #allocation6 [shape = 'u8[65536]{0}', space=vmem, size = 0x10000, scoped, tag = 'input window, operand 1, single buffered']
    #allocation7 [shape = 's32[1]{0}', space=sflag, size = 0x4, scoped, tag = 'scoped memory for tpu_custom_call.1']
    #allocation8 [shape = 'u8[131072]{0}', space=vmem, size = 0x20000, scoped, tag = 'output window, operand 0, single buffered']
    %8 = vsyncpa [#allocation4], 0
    %9 = vsyncpa [#allocation7], 0
    %10 = vsyncpa [#allocation5], 0
    // Predicated region
    $region2: #{tpu_custom_call.1} parent=1 // pred_check
      _
    $region3: #{tpu_custom_call.1} parent=1 // pred_check_branch
      %12 = sbr.rel (0) target = $region5
    $region4: #{tpu_custom_call.1} parent=1 // pred_region
      %14 = vsyncadd [#allocation4], 0
      %s15 = sshll.u32 %s0, 4
      %s16 = int_to_ptr.hbm [resolvable:$true] %s15
      %s17 = sshll.u32 [#allocation3], 4
      %s18 = int_to_ptr.vmem [resolvable:$true] %s17
      %23 = dma.hbm_to_vmem [thread:$0]  %s16, 8192, %s18, [#allocation4], 128, 128, 8
    $region5: #{tpu_custom_call.1} parent=1 // pred_fallthru
      _
    // Predicated region
    $region6: #{tpu_custom_call.1} parent=1 // pred_check
      _
    $region7: #{tpu_custom_call.1} parent=1 // pred_check_branch
      %25 = sbr.rel (0) target = $region9
    $region8: #{tpu_custom_call.1} parent=1 // pred_region
      %27 = vsyncadd [#allocation7], 0
      %s28 = sshll.u32 %s1, 4
      %s29 = int_to_ptr.hbm [resolvable:$true] %s28
      %s30 = sshll.u32 [#allocation6], 4
      %s31 = int_to_ptr.vmem [resolvable:$true] %s30
      %36 = dma.hbm_to_vmem [thread:$0]  %s29, 2048, %s31, [#allocation7], 64, 64, 4
    $region9: #{tpu_custom_call.1} parent=1 // pred_fallthru
      _
    // Predicated region
    $region10: #{tpu_custom_call.1} parent=1 // pred_check
      _
    $region11: #{tpu_custom_call.1} parent=1 // pred_check_branch
      %38 = sbr.rel (0) target = $region13
    $region12: #{tpu_custom_call.1} parent=1 // pred_region
      _
    $region13: #{tpu_custom_call.1} parent=1 // pred_fallthru
      _
    // Predicated region
    $region14: #{tpu_custom_call.1} parent=1 // pred_check
      _
    $region15: #{tpu_custom_call.1} parent=1 // pred_check_branch
      %40 = sbr.rel (0) target = $region17
    $region16: #{tpu_custom_call.1} parent=1 // pred_region
      %42 = dma.done [#allocation4], 8192
    $region17: #{tpu_custom_call.1} parent=1 // pred_fallthru
      _
    // Predicated region
    $region18: #{tpu_custom_call.1} parent=1 // pred_check
      _
    $region19: #{tpu_custom_call.1} parent=1 // pred_check_branch
      %44 = sbr.rel (0) target = $region21
    $region20: #{tpu_custom_call.1} parent=1 // pred_region
      %46 = dma.done [#allocation7], 2048
    $region21: #{tpu_custom_call.1} parent=1 // pred_fallthru
      _
    %p47 = scmp.eq.s32.totalorder 0, 0
    // Predicated region
    $region22: #{tpu_custom_call.1} parent=1 // pred_check
      %p48 = pneg %p47
    $region23: #{tpu_custom_call.1} parent=1 // pred_check_branch
      %50 = sbr.rel (%p48) target = $region25
    $region24: #{tpu_custom_call.1} parent=1 // pred_region
      %51 = vst [vmem:[#allocation2] sm:$0xff] 0.0
      %52 = vst [vmem:[#allocation2 + $0x8] sm:$0xff] 0.0
      %53 = vst [vmem:[#allocation2 + $0x10] sm:$0xff] 0.0
      %54 = vst [vmem:[#allocation2 + $0x18] sm:$0xff] 0.0
      %55 = vst [vmem:[#allocation2 + $0x20] sm:$0xff] 0.0
      %56 = vst [vmem:[#allocation2 + $0x28] sm:$0xff] 0.0
      %57 = vst [vmem:[#allocation2 + $0x30] sm:$0xff] 0.0
      %58 = vst [vmem:[#allocation2 + $0x38] sm:$0xff] 0.0
      %59 = vst [vmem:[#allocation2 + $0x40] sm:$0xff] 0.0
      %60 = vst [vmem:[#allocation2 + $0x48] sm:$0xff] 0.0
      %61 = vst [vmem:[#allocation2 + $0x50] sm:$0xff] 0.0
      %62 = vst [vmem:[#allocation2 + $0x58] sm:$0xff] 0.0
      %63 = vst [vmem:[#allocation2 + $0x60] sm:$0xff] 0.0
      %64 = vst [vmem:[#allocation2 + $0x68] sm:$0xff] 0.0
      %65 = vst [vmem:[#allocation2 + $0x70] sm:$0xff] 0.0
      %66 = vst [vmem:[#allocation2 + $0x78] sm:$0xff] 0.0
      %67 = vst [vmem:[#allocation2 + $0x80] sm:$0xff] 0.0
      %68 = vst [vmem:[#allocation2 + $0x88] sm:$0xff] 0.0
      %69 = vst [vmem:[#allocation2 + $0x90] sm:$0xff] 0.0
      %70 = vst [vmem:[#allocation2 + $0x98] sm:$0xff] 0.0
      %71 = vst [vmem:[#allocation2 + $0xa0] sm:$0xff] 0.0
      %72 = vst [vmem:[#allocation2 + $0xa8] sm:$0xff] 0.0
      %73 = vst [vmem:[#allocation2 + $0xb0] sm:$0xff] 0.0
      %74 = vst [vmem:[#allocation2 + $0xb8] sm:$0xff] 0.0
      %75 = vst [vmem:[#allocation2 + $0xc0] sm:$0xff] 0.0
      %76 = vst [vmem:[#allocation2 + $0xc8] sm:$0xff] 0.0
      %77 = vst [vmem:[#allocation2 + $0xd0] sm:$0xff] 0.0
      %78 = vst [vmem:[#allocation2 + $0xd8] sm:$0xff] 0.0
      %79 = vst [vmem:[#allocation2 + $0xe0] sm:$0xff] 0.0
      %80 = vst [vmem:[#allocation2 + $0xe8] sm:$0xff] 0.0
      %81 = vst [vmem:[#allocation2 + $0xf0] sm:$0xff] 0.0
      %82 = vst [vmem:[#allocation2 + $0xf8] sm:$0xff] 0.0
      %83 = vst [vmem:[#allocation2 + $0x100] sm:$0xff] 0.0
      %84 = vst [vmem:[#allocation2 + $0x108] sm:$0xff] 0.0
      %85 = vst [vmem:[#allocation2 + $0x110] sm:$0xff] 0.0
      %86 = vst [vmem:[#allocation2 + $0x118] sm:$0xff] 0.0
      %87 = vst [vmem:[#allocation2 + $0x120] sm:$0xff] 0.0
      %88 = vst [vmem:[#allocation2 + $0x128] sm:$0xff] 0.0
      %89 = vst [vmem:[#allocation2 + $0x130] sm:$0xff] 0.0
      %90 = vst [vmem:[#allocation2 + $0x138] sm:$0xff] 0.0
      %91 = vst [vmem:[#allocation2 + $0x140] sm:$0xff] 0.0
      %92 = vst [vmem:[#allocation2 + $0x148] sm:$0xff] 0.0
      %93 = vst [vmem:[#allocation2 + $0x150] sm:$0xff] 0.0
      %94 = vst [vmem:[#allocation2 + $0x158] sm:$0xff] 0.0
      %95 = vst [vmem:[#allocation2 + $0x160] sm:$0xff] 0.0
      %96 = vst [vmem:[#allocation2 + $0x168] sm:$0xff] 0.0
      %97 = vst [vmem:[#allocation2 + $0x170] sm:$0xff] 0.0
      %98 = vst [vmem:[#allocation2 + $0x178] sm:$0xff] 0.0
      %99 = vst [vmem:[#allocation2 + $0x180] sm:$0xff] 0.0
      %100 = vst [vmem:[#allocation2 + $0x188] sm:$0xff] 0.0
      %101 = vst [vmem:[#allocation2 + $0x190] sm:$0xff] 0.0
      %102 = vst [vmem:[#allocation2 + $0x198] sm:$0xff] 0.0
      %103 = vst [vmem:[#allocation2 + $0x1a0] sm:$0xff] 0.0
      %104 = vst [vmem:[#allocation2 + $0x1a8] sm:$0xff] 0.0
      %105 = vst [vmem:[#allocation2 + $0x1b0] sm:$0xff] 0.0
      %106 = vst [vmem:[#allocation2 + $0x1b8] sm:$0xff] 0.0
      %107 = vst [vmem:[#allocation2 + $0x1c0] sm:$0xff] 0.0
      %108 = vst [vmem:[#allocation2 + $0x1c8] sm:$0xff] 0.0
      %109 = vst [vmem:[#allocation2 + $0x1d0] sm:$0xff] 0.0
      %110 = vst [vmem:[#allocation2 + $0x1d8] sm:$0xff] 0.0
      %111 = vst [vmem:[#allocation2 + $0x1e0] sm:$0xff] 0.0
      %112 = vst [vmem:[#allocation2 + $0x1e8] sm:$0xff] 0.0
      %113 = vst [vmem:[#allocation2 + $0x1f0] sm:$0xff] 0.0
      %114 = vst [vmem:[#allocation2 + $0x1f8] sm:$0xff] 0.0
    $region25: #{tpu_custom_call.1} parent=1 // pred_fallthru
      _
    %v115 = vld [vmem:[#allocation2] sm:$0xff]
    %v116 = vld [vmem:[#allocation2 + $0x8] sm:$0xff]
    %v117 = vld [vmem:[#allocation2 + $0x10] sm:$0xff]
    %v118 = vld [vmem:[#allocation2 + $0x18] sm:$0xff]
    %v119 = vld [vmem:[#allocation2 + $0x20] sm:$0xff]
    %v120 = vld [vmem:[#allocation2 + $0x28] sm:$0xff]
    %v121 = vld [vmem:[#allocation2 + $0x30] sm:$0xff]
    %v122 = vld [vmem:[#allocation2 + $0x38] sm:$0xff]
    %v123 = vld [vmem:[#allocation2 + $0x40] sm:$0xff]
    %v124 = vld [vmem:[#allocation2 + $0x48] sm:$0xff]
    %v125 = vld [vmem:[#allocation2 + $0x50] sm:$0xff]
    %v126 = vld [vmem:[#allocation2 + $0x58] sm:$0xff]
    %v127 = vld [vmem:[#allocation2 + $0x60] sm:$0xff]
    %v128 = vld [vmem:[#allocation2 + $0x68] sm:$0xff]
    %v129 = vld [vmem:[#allocation2 + $0x70] sm:$0xff]
    %v130 = vld [vmem:[#allocation2 + $0x78] sm:$0xff]
    %v131 = vld [vmem:[#allocation2 + $0x80] sm:$0xff]
    %v132 = vld [vmem:[#allocation2 + $0x88] sm:$0xff]
    %v133 = vld [vmem:[#allocation2 + $0x90] sm:$0xff]
    %v134 = vld [vmem:[#allocation2 + $0x98] sm:$0xff]
    %v135 = vld [vmem:[#allocation2 + $0xa0] sm:$0xff]
    %v136 = vld [vmem:[#allocation2 + $0xa8] sm:$0xff]
    %v137 = vld [vmem:[#allocation2 + $0xb0] sm:$0xff]
    %v138 = vld [vmem:[#allocation2 + $0xb8] sm:$0xff]
    %v139 = vld [vmem:[#allocation2 + $0xc0] sm:$0xff]
    %v140 = vld [vmem:[#allocation2 + $0xc8] sm:$0xff]
    %v141 = vld [vmem:[#allocation2 + $0xd0] sm:$0xff]
    %v142 = vld [vmem:[#allocation2 + $0xd8] sm:$0xff]
    %v143 = vld [vmem:[#allocation2 + $0xe0] sm:$0xff]
    %v144 = vld [vmem:[#allocation2 + $0xe8] sm:$0xff]
    %v145 = vld [vmem:[#allocation2 + $0xf0] sm:$0xff]
    %v146 = vld [vmem:[#allocation2 + $0xf8] sm:$0xff]
    %v147 = vld [vmem:[#allocation2 + $0x100] sm:$0xff]
    %v148 = vld [vmem:[#allocation2 + $0x108] sm:$0xff]
    %v149 = vld [vmem:[#allocation2 + $0x110] sm:$0xff]
    %v150 = vld [vmem:[#allocation2 + $0x118] sm:$0xff]
    %v151 = vld [vmem:[#allocation2 + $0x120] sm:$0xff]
    %v152 = vld [vmem:[#allocation2 + $0x128] sm:$0xff]
    %v153 = vld [vmem:[#allocation2 + $0x130] sm:$0xff]
    %v154 = vld [vmem:[#allocation2 + $0x138] sm:$0xff]
    %v155 = vld [vmem:[#allocation2 + $0x140] sm:$0xff]
    %v156 = vld [vmem:[#allocation2 + $0x148] sm:$0xff]
    %v157 = vld [vmem:[#allocation2 + $0x150] sm:$0xff]
    %v158 = vld [vmem:[#allocation2 + $0x158] sm:$0xff]
    %v159 = vld [vmem:[#allocation2 + $0x160] sm:$0xff]
    %v160 = vld [vmem:[#allocation2 + $0x168] sm:$0xff]
    %v161 = vld [vmem:[#allocation2 + $0x170] sm:$0xff]
    %v162 = vld [vmem:[#allocation2 + $0x178] sm:$0xff]
    %v163 = vld [vmem:[#allocation2 + $0x180] sm:$0xff]
    %v164 = vld [vmem:[#allocation2 + $0x188] sm:$0xff]
    %v165 = vld [vmem:[#allocation2 + $0x190] sm:$0xff]
    %v166 = vld [vmem:[#allocation2 + $0x198] sm:$0xff]
    %v167 = vld [vmem:[#allocation2 + $0x1a0] sm:$0xff]
    %v168 = vld [vmem:[#allocation2 + $0x1a8] sm:$0xff]
    %v169 = vld [vmem:[#allocation2 + $0x1b0] sm:$0xff]
    %v170 = vld [vmem:[#allocation2 + $0x1b8] sm:$0xff]
    %v171 = vld [vmem:[#allocation2 + $0x1c0] sm:$0xff]
    %v172 = vld [vmem:[#allocation2 + $0x1c8] sm:$0xff]
    %v173 = vld [vmem:[#allocation2 + $0x1d0] sm:$0xff]
    %v174 = vld [vmem:[#allocation2 + $0x1d8] sm:$0xff]
    %v175 = vld [vmem:[#allocation2 + $0x1e0] sm:$0xff]
    %v176 = vld [vmem:[#allocation2 + $0x1e8] sm:$0xff]
    %v177 = vld [vmem:[#allocation2 + $0x1f0] sm:$0xff]
    %v178 = vld [vmem:[#allocation2 + $0x1f8] sm:$0xff]
    %v179 = vld [vmem:[#allocation3] sm:$0xff]
    %v180 = vld [vmem:[#allocation3 + $0x8] sm:$0xff]
    %v181 = vld [vmem:[#allocation3 + $0x10] sm:$0xff]
    %v182 = vld [vmem:[#allocation3 + $0x18] sm:$0xff]
    %v183 = vld [vmem:[#allocation3 + $0x20] sm:$0xff]
    %v184 = vld [vmem:[#allocation3 + $0x28] sm:$0xff]
    %v185 = vld [vmem:[#allocation3 + $0x30] sm:$0xff]
    %v186 = vld [vmem:[#allocation3 + $0x38] sm:$0xff]
    %v187 = vld [vmem:[#allocation3 + $0x40] sm:$0xff]
    %v188 = vld [vmem:[#allocation3 + $0x48] sm:$0xff]
    %v189 = vld [vmem:[#allocation3 + $0x50] sm:$0xff]
    %v190 = vld [vmem:[#allocation3 + $0x58] sm:$0xff]
    %v191 = vld [vmem:[#allocation3 + $0x60] sm:$0xff]
    %v192 = vld [vmem:[#allocation3 + $0x68] sm:$0xff]
    %v193 = vld [vmem:[#allocation3 + $0x70] sm:$0xff]
    %v194 = vld [vmem:[#allocation3 + $0x78] sm:$0xff]
    %v195 = vld [vmem:[#allocation3 + $0x80] sm:$0xff]
    %v196 = vld [vmem:[#allocation3 + $0x88] sm:$0xff]
    %v197 = vld [vmem:[#allocation3 + $0x90] sm:$0xff]
    %v198 = vld [vmem:[#allocation3 + $0x98] sm:$0xff]
    %v199 = vld [vmem:[#allocation3 + $0xa0] sm:$0xff]
    %v200 = vld [vmem:[#allocation3 + $0xa8] sm:$0xff]
    %v201 = vld [vmem:[#allocation3 + $0xb0] sm:$0xff]
    %v202 = vld [vmem:[#allocation3 + $0xb8] sm:$0xff]
    %v203 = vld [vmem:[#allocation3 + $0xc0] sm:$0xff]
    %v204 = vld [vmem:[#allocation3 + $0xc8] sm:$0xff]
    %v205 = vld [vmem:[#allocation3 + $0xd0] sm:$0xff]
    %v206 = vld [vmem:[#allocation3 + $0xd8] sm:$0xff]
    %v207 = vld [vmem:[#allocation3 + $0xe0] sm:$0xff]
    %v208 = vld [vmem:[#allocation3 + $0xe8] sm:$0xff]
    %v209 = vld [vmem:[#allocation3 + $0xf0] sm:$0xff]
    %v210 = vld [vmem:[#allocation3 + $0xf8] sm:$0xff]
    %v211 = vld [vmem:[#allocation3 + $0x100] sm:$0xff]
    %v212 = vld [vmem:[#allocation3 + $0x108] sm:$0xff]
    %v213 = vld [vmem:[#allocation3 + $0x110] sm:$0xff]
    %v214 = vld [vmem:[#allocation3 + $0x118] sm:$0xff]
    %v215 = vld [vmem:[#allocation3 + $0x120] sm:$0xff]
    %v216 = vld [vmem:[#allocation3 + $0x128] sm:$0xff]
    %v217 = vld [vmem:[#allocation3 + $0x130] sm:$0xff]
    %v218 = vld [vmem:[#allocation3 + $0x138] sm:$0xff]
    %v219 = vld [vmem:[#allocation3 + $0x140] sm:$0xff]
    %v220 = vld [vmem:[#allocation3 + $0x148] sm:$0xff]
    %v221 = vld [vmem:[#allocation3 + $0x150] sm:$0xff]
    %v222 = vld [vmem:[#allocation3 + $0x158] sm:$0xff]
    %v223 = vld [vmem:[#allocation3 + $0x160] sm:$0xff]
    %v224 = vld [vmem:[#allocation3 + $0x168] sm:$0xff]
    %v225 = vld [vmem:[#allocation3 + $0x170] sm:$0xff]
    %v226 = vld [vmem:[#allocation3 + $0x178] sm:$0xff]
    %v227 = vld [vmem:[#allocation3 + $0x180] sm:$0xff]
    %v228 = vld [vmem:[#allocation3 + $0x188] sm:$0xff]
    %v229 = vld [vmem:[#allocation3 + $0x190] sm:$0xff]
    %v230 = vld [vmem:[#allocation3 + $0x198] sm:$0xff]
    %v231 = vld [vmem:[#allocation3 + $0x1a0] sm:$0xff]
    %v232 = vld [vmem:[#allocation3 + $0x1a8] sm:$0xff]
    %v233 = vld [vmem:[#allocation3 + $0x1b0] sm:$0xff]
    %v234 = vld [vmem:[#allocation3 + $0x1b8] sm:$0xff]
    %v235 = vld [vmem:[#allocation3 + $0x1c0] sm:$0xff]
    %v236 = vld [vmem:[#allocation3 + $0x1c8] sm:$0xff]
    %v237 = vld [vmem:[#allocation3 + $0x1d0] sm:$0xff]
    %v238 = vld [vmem:[#allocation3 + $0x1d8] sm:$0xff]
    %v239 = vld [vmem:[#allocation3 + $0x1e0] sm:$0xff]
    %v240 = vld [vmem:[#allocation3 + $0x1e8] sm:$0xff]
    %v241 = vld [vmem:[#allocation3 + $0x1f0] sm:$0xff]
    %v242 = vld [vmem:[#allocation3 + $0x1f8] sm:$0xff]
    %v243 = vld [vmem:[#allocation6] sm:$0xf]
    %v244 = vld [vmem:[#allocation6 + $0x4] sm:$0xf]
    %v245 = vld [vmem:[#allocation6 + $0x8] sm:$0xf]
    %v246 = vld [vmem:[#allocation6 + $0xc] sm:$0xf]
    %v247 = vld [vmem:[#allocation6 + $0x10] sm:$0xf]
    %v248 = vld [vmem:[#allocation6 + $0x14] sm:$0xf]
    %v249 = vld [vmem:[#allocation6 + $0x18] sm:$0xf]
    %v250 = vld [vmem:[#allocation6 + $0x1c] sm:$0xf]
    %v251 = vld [vmem:[#allocation6 + $0x20] sm:$0xf]
    %v252 = vld [vmem:[#allocation6 + $0x24] sm:$0xf]
    %v253 = vld [vmem:[#allocation6 + $0x28] sm:$0xf]
    %v254 = vld [vmem:[#allocation6 + $0x2c] sm:$0xf]
    %v255 = vld [vmem:[#allocation6 + $0x30] sm:$0xf]
    %v256 = vld [vmem:[#allocation6 + $0x34] sm:$0xf]
    %v257 = vld [vmem:[#allocation6 + $0x38] sm:$0xf]
    %v258 = vld [vmem:[#allocation6 + $0x3c] sm:$0xf]
    %v259 = vld [vmem:[#allocation6 + $0x40] sm:$0xf]
    %v260 = vld [vmem:[#allocation6 + $0x44] sm:$0xf]
    %v261 = vld [vmem:[#allocation6 + $0x48] sm:$0xf]
    %v262 = vld [vmem:[#allocation6 + $0x4c] sm:$0xf]
    %v263 = vld [vmem:[#allocation6 + $0x50] sm:$0xf]
    %v264 = vld [vmem:[#allocation6 + $0x54] sm:$0xf]
    %v265 = vld [vmem:[#allocation6 + $0x58] sm:$0xf]
    %v266 = vld [vmem:[#allocation6 + $0x5c] sm:$0xf]
    %v267 = vld [vmem:[#allocation6 + $0x60] sm:$0xf]
    %v268 = vld [vmem:[#allocation6 + $0x64] sm:$0xf]
    %v269 = vld [vmem:[#allocation6 + $0x68] sm:$0xf]
    %v270 = vld [vmem:[#allocation6 + $0x6c] sm:$0xf]
    %v271 = vld [vmem:[#allocation6 + $0x70] sm:$0xf]
    %v272 = vld [vmem:[#allocation6 + $0x74] sm:$0xf]
    %v273 = vld [vmem:[#allocation6 + $0x78] sm:$0xf]
    %v274 = vld [vmem:[#allocation6 + $0x7c] sm:$0xf]
    %v339 = vunpack.c.l.b16 %v179
    %v340 = vunpack.c.h.b16 %v179
    %v341 = vunpack.c.l.b16 %v180
    %v342 = vunpack.c.h.b16 %v180
    %v343 = vunpack.c.l.b16 %v181
    %v344 = vunpack.c.h.b16 %v181
    %v345 = vunpack.c.l.b16 %v182
    %v346 = vunpack.c.h.b16 %v182
    %v347 = vunpack.c.l.b16 %v183
    %v348 = vunpack.c.h.b16 %v183
    %v349 = vunpack.c.l.b16 %v184
    %v350 = vunpack.c.h.b16 %v184
    %v351 = vunpack.c.l.b16 %v185
    %v352 = vunpack.c.h.b16 %v185
    %v353 = vunpack.c.l.b16 %v186
    %v354 = vunpack.c.h.b16 %v186
    %v355 = vunpack.c.l.b16 %v187
    %v356 = vunpack.c.h.b16 %v187
    %v357 = vunpack.c.l.b16 %v188
    %v358 = vunpack.c.h.b16 %v188
    %v359 = vunpack.c.l.b16 %v189
    %v360 = vunpack.c.h.b16 %v189
    %v361 = vunpack.c.l.b16 %v190
    %v362 = vunpack.c.h.b16 %v190
    %v363 = vunpack.c.l.b16 %v191
    %v364 = vunpack.c.h.b16 %v191
    %v365 = vunpack.c.l.b16 %v192
    %v366 = vunpack.c.h.b16 %v192
    %v367 = vunpack.c.l.b16 %v193
    %v368 = vunpack.c.h.b16 %v193
    %v369 = vunpack.c.l.b16 %v194
    %v370 = vunpack.c.h.b16 %v194
    %v371 = vunpack.c.l.b16 %v195
    %v372 = vunpack.c.h.b16 %v195
    %v373 = vunpack.c.l.b16 %v196
    %v374 = vunpack.c.h.b16 %v196
    %v375 = vunpack.c.l.b16 %v197
    %v376 = vunpack.c.h.b16 %v197
    %v377 = vunpack.c.l.b16 %v198
    %v378 = vunpack.c.h.b16 %v198
    %v379 = vunpack.c.l.b16 %v199
    %v380 = vunpack.c.h.b16 %v199
    %v381 = vunpack.c.l.b16 %v200
    %v382 = vunpack.c.h.b16 %v200
    %v383 = vunpack.c.l.b16 %v201
    %v384 = vunpack.c.h.b16 %v201
    %v385 = vunpack.c.l.b16 %v202
    %v386 = vunpack.c.h.b16 %v202
    %v387 = vunpack.c.l.b16 %v203
    %v388 = vunpack.c.h.b16 %v203
    %v389 = vunpack.c.l.b16 %v204
    %v390 = vunpack.c.h.b16 %v204
    %v391 = vunpack.c.l.b16 %v205
    %v392 = vunpack.c.h.b16 %v205
    %v393 = vunpack.c.l.b16 %v206
    %v394 = vunpack.c.h.b16 %v206
    %v395 = vunpack.c.l.b16 %v207
    %v396 = vunpack.c.h.b16 %v207
    %v397 = vunpack.c.l.b16 %v208
    %v398 = vunpack.c.h.b16 %v208
    %v399 = vunpack.c.l.b16 %v209
    %v400 = vunpack.c.h.b16 %v209
    %v401 = vunpack.c.l.b16 %v210
    %v402 = vunpack.c.h.b16 %v210
    %v403 = vunpack.c.l.b16 %v211
    %v404 = vunpack.c.h.b16 %v211
    %v405 = vunpack.c.l.b16 %v212
    %v406 = vunpack.c.h.b16 %v212
    %v407 = vunpack.c.l.b16 %v213
    %v408 = vunpack.c.h.b16 %v213
    %v409 = vunpack.c.l.b16 %v214
    %v410 = vunpack.c.h.b16 %v214
    %v411 = vunpack.c.l.b16 %v215
    %v412 = vunpack.c.h.b16 %v215
    %v413 = vunpack.c.l.b16 %v216
    %v414 = vunpack.c.h.b16 %v216
    %v415 = vunpack.c.l.b16 %v217
    %v416 = vunpack.c.h.b16 %v217
    %v417 = vunpack.c.l.b16 %v218
    %v418 = vunpack.c.h.b16 %v218
    %v419 = vunpack.c.l.b16 %v219
    %v420 = vunpack.c.h.b16 %v219
    %v421 = vunpack.c.l.b16 %v220
    %v422 = vunpack.c.h.b16 %v220
    %v423 = vunpack.c.l.b16 %v221
    %v424 = vunpack.c.h.b16 %v221
    %v425 = vunpack.c.l.b16 %v222
    %v426 = vunpack.c.h.b16 %v222
    %v427 = vunpack.c.l.b16 %v223
    %v428 = vunpack.c.h.b16 %v223
    %v429 = vunpack.c.l.b16 %v224
    %v430 = vunpack.c.h.b16 %v224
    %v431 = vunpack.c.l.b16 %v225
    %v432 = vunpack.c.h.b16 %v225
    %v433 = vunpack.c.l.b16 %v226
    %v434 = vunpack.c.h.b16 %v226
    %v435 = vunpack.c.l.b16 %v227
    %v436 = vunpack.c.h.b16 %v227
    %v437 = vunpack.c.l.b16 %v228
    %v438 = vunpack.c.h.b16 %v228
    %v439 = vunpack.c.l.b16 %v229
    %v440 = vunpack.c.h.b16 %v229
    %v441 = vunpack.c.l.b16 %v230
    %v442 = vunpack.c.h.b16 %v230
    %v443 = vunpack.c.l.b16 %v231
    %v444 = vunpack.c.h.b16 %v231
    %v445 = vunpack.c.l.b16 %v232
    %v446 = vunpack.c.h.b16 %v232
    %v447 = vunpack.c.l.b16 %v233
    %v448 = vunpack.c.h.b16 %v233
    %v449 = vunpack.c.l.b16 %v234
    %v450 = vunpack.c.h.b16 %v234
    %v451 = vunpack.c.l.b16 %v235
    %v452 = vunpack.c.h.b16 %v235
    %v453 = vunpack.c.l.b16 %v236
    %v454 = vunpack.c.h.b16 %v236
    %v455 = vunpack.c.l.b16 %v237
    %v456 = vunpack.c.h.b16 %v237
    %v457 = vunpack.c.l.b16 %v238
    %v458 = vunpack.c.h.b16 %v238
    %v459 = vunpack.c.l.b16 %v239
    %v460 = vunpack.c.h.b16 %v239
    %v461 = vunpack.c.l.b16 %v240
    %v462 = vunpack.c.h.b16 %v240
    %v463 = vunpack.c.l.b16 %v241
    %v464 = vunpack.c.h.b16 %v241
    %v465 = vunpack.c.l.b16 %v242
    %v466 = vunpack.c.h.b16 %v242
    %v467 = vpack.c.b16 %v341, %v339
    %v468 = vpack.c.b16 %v342, %v340
    %v469 = vpack.c.b16 %v345, %v343
    %v470 = vpack.c.b16 %v346, %v344
    %v471 = vpack.c.b16 %v349, %v347
    %v472 = vpack.c.b16 %v350, %v348
    %v473 = vpack.c.b16 %v353, %v351
    %v474 = vpack.c.b16 %v354, %v352
    %v475 = vpack.c.b16 %v357, %v355
    %v476 = vpack.c.b16 %v358, %v356
    %v477 = vpack.c.b16 %v361, %v359
    %v478 = vpack.c.b16 %v362, %v360
    %v479 = vpack.c.b16 %v365, %v363
    %v480 = vpack.c.b16 %v366, %v364
    %v481 = vpack.c.b16 %v369, %v367
    %v482 = vpack.c.b16 %v370, %v368
    %v483 = vpack.c.b16 %v373, %v371
    %v484 = vpack.c.b16 %v374, %v372
    %v485 = vpack.c.b16 %v377, %v375
    %v486 = vpack.c.b16 %v378, %v376
    %v487 = vpack.c.b16 %v381, %v379
    %v488 = vpack.c.b16 %v382, %v380
    %v489 = vpack.c.b16 %v385, %v383
    %v490 = vpack.c.b16 %v386, %v384
    %v491 = vpack.c.b16 %v389, %v387
    %v492 = vpack.c.b16 %v390, %v388
    %v493 = vpack.c.b16 %v393, %v391
    %v494 = vpack.c.b16 %v394, %v392
    %v495 = vpack.c.b16 %v397, %v395
    %v496 = vpack.c.b16 %v398, %v396
    %v497 = vpack.c.b16 %v401, %v399
    %v498 = vpack.c.b16 %v402, %v400
    %v499 = vpack.c.b16 %v405, %v403
    %v500 = vpack.c.b16 %v406, %v404
    %v501 = vpack.c.b16 %v409, %v407
    %v502 = vpack.c.b16 %v410, %v408
    %v503 = vpack.c.b16 %v413, %v411
    %v504 = vpack.c.b16 %v414, %v412
    %v505 = vpack.c.b16 %v417, %v415
    %v506 = vpack.c.b16 %v418, %v416
    %v507 = vpack.c.b16 %v421, %v419
    %v508 = vpack.c.b16 %v422, %v420
    %v509 = vpack.c.b16 %v425, %v423
    %v510 = vpack.c.b16 %v426, %v424
    %v511 = vpack.c.b16 %v429, %v427
    %v512 = vpack.c.b16 %v430, %v428
    %v513 = vpack.c.b16 %v433, %v431
    %v514 = vpack.c.b16 %v434, %v432
    %v515 = vpack.c.b16 %v437, %v435
    %v516 = vpack.c.b16 %v438, %v436
    %v517 = vpack.c.b16 %v441, %v439
    %v518 = vpack.c.b16 %v442, %v440
    %v519 = vpack.c.b16 %v445, %v443
    %v520 = vpack.c.b16 %v446, %v444
    %v521 = vpack.c.b16 %v449, %v447
    %v522 = vpack.c.b16 %v450, %v448
    %v523 = vpack.c.b16 %v453, %v451
    %v524 = vpack.c.b16 %v454, %v452
    %v525 = vpack.c.b16 %v457, %v455
    %v526 = vpack.c.b16 %v458, %v456
    %v527 = vpack.c.b16 %v461, %v459
    %v528 = vpack.c.b16 %v462, %v460
    %v529 = vpack.c.b16 %v465, %v463
    %v530 = vpack.c.b16 %v466, %v464
    %v627 = vunpack.c.l.b16 %v243
    %v628 = vunpack.c.l.b16 %v244
    %v629 = vunpack.c.l.b16 %v245
    %v630 = vunpack.c.l.b16 %v246
    %v631 = vunpack.c.l.b16 %v247
    %v632 = vunpack.c.l.b16 %v248
    %v633 = vunpack.c.l.b16 %v249
    %v634 = vunpack.c.l.b16 %v250
    %v635 = vunpack.c.l.b16 %v251
    %v636 = vunpack.c.l.b16 %v252
    %v637 = vunpack.c.l.b16 %v253
    %v638 = vunpack.c.l.b16 %v254
    %v639 = vunpack.c.l.b16 %v255
    %v640 = vunpack.c.l.b16 %v256
    %v641 = vunpack.c.l.b16 %v257
    %v642 = vunpack.c.l.b16 %v258
    %v643 = vunpack.c.l.b16 %v259
    %v644 = vunpack.c.l.b16 %v260
    %v645 = vunpack.c.l.b16 %v261
    %v646 = vunpack.c.l.b16 %v262
    %v647 = vunpack.c.l.b16 %v263
    %v648 = vunpack.c.l.b16 %v264
    %v649 = vunpack.c.l.b16 %v265
    %v650 = vunpack.c.l.b16 %v266
    %v651 = vunpack.c.l.b16 %v267
    %v652 = vunpack.c.l.b16 %v268
    %v653 = vunpack.c.l.b16 %v269
    %v654 = vunpack.c.l.b16 %v270
    %v655 = vunpack.c.l.b16 %v271
    %v656 = vunpack.c.l.b16 %v272
    %v657 = vunpack.c.l.b16 %v273
    %v658 = vunpack.c.l.b16 %v274
    %v659 = vpack.c.b16 %v628, %v627
    %v660 = vpack.c.b16 %v630, %v629
    %v661 = vpack.c.b16 %v632, %v631
    %v662 = vpack.c.b16 %v634, %v633
    %v663 = vpack.c.b16 %v636, %v635
    %v664 = vpack.c.b16 %v638, %v637
    %v665 = vpack.c.b16 %v640, %v639
    %v666 = vpack.c.b16 %v642, %v641
    %v667 = vpack.c.b16 %v644, %v643
    %v668 = vpack.c.b16 %v646, %v645
    %v669 = vpack.c.b16 %v648, %v647
    %v670 = vpack.c.b16 %v650, %v649
    %v671 = vpack.c.b16 %v652, %v651
    %v672 = vpack.c.b16 %v654, %v653
    %v673 = vpack.c.b16 %v656, %v655
    %v674 = vpack.c.b16 %v658, %v657
    %691 = vmatpush.bf16.msra.mxu0 %v666
    %692 = vmatpush.bf16.msra.mxu0 %v665
    %693 = vmatpush.bf16.msra.mxu0 %v664
    %694 = vmatpush.bf16.msra.mxu0 %v663
    %695 = vmatpush.bf16.msra.mxu0 %v662
    %696 = vmatpush.bf16.msra.mxu0 %v661
    %697 = vmatpush.bf16.msra.mxu0 %v660
    %698 = vmatpush.bf16.msra.mxu0 %v659
    %699 = vmatmul.bf16.gmra.mxu0 %v467
    %v700 = vpop.f32.mrf.mxu0
    %v701 = vadd.f32 0.0, %v700
    %v702 = vpop.f32.mrf.mxu0
    %v703 = vadd.f32 0.0, %v702
    %704 = vmatmul.bf16.gmra.mxu0 %v469
    %v705 = vpop.f32.mrf.mxu0
    %v706 = vadd.f32 0.0, %v705
    %v707 = vpop.f32.mrf.mxu0
    %v708 = vadd.f32 0.0, %v707
    %709 = vmatmul.bf16.gmra.mxu0 %v471
    %v710 = vpop.f32.mrf.mxu0
    %v711 = vadd.f32 0.0, %v710
    %v712 = vpop.f32.mrf.mxu0
    %v713 = vadd.f32 0.0, %v712
    %714 = vmatmul.bf16.gmra.mxu0 %v473
    %v715 = vpop.f32.mrf.mxu0
    %v716 = vadd.f32 0.0, %v715
    %v717 = vpop.f32.mrf.mxu0
    %v718 = vadd.f32 0.0, %v717
    %719 = vmatmul.bf16.gmra.mxu0 %v475
    %v720 = vpop.f32.mrf.mxu0
    %v721 = vadd.f32 0.0, %v720
    %v722 = vpop.f32.mrf.mxu0
    %v723 = vadd.f32 0.0, %v722
    %724 = vmatmul.bf16.gmra.mxu0 %v477
    %v725 = vpop.f32.mrf.mxu0
    %v726 = vadd.f32 0.0, %v725
    %v727 = vpop.f32.mrf.mxu0
    %v728 = vadd.f32 0.0, %v727
    %729 = vmatmul.bf16.gmra.mxu0 %v479
    %v730 = vpop.f32.mrf.mxu0
    %v731 = vadd.f32 0.0, %v730
    %v732 = vpop.f32.mrf.mxu0
    %v733 = vadd.f32 0.0, %v732
    %734 = vmatmul.bf16.gmra.mxu0 %v481
    %v735 = vpop.f32.mrf.mxu0
    %v736 = vadd.f32 0.0, %v735
    %v737 = vpop.f32.mrf.mxu0
    %v738 = vadd.f32 0.0, %v737
    %739 = vmatmul.bf16.gmra.mxu0 %v483
    %v740 = vpop.f32.mrf.mxu0
    %v741 = vadd.f32 0.0, %v740
    %v742 = vpop.f32.mrf.mxu0
    %v743 = vadd.f32 0.0, %v742
    %744 = vmatmul.bf16.gmra.mxu0 %v485
    %v745 = vpop.f32.mrf.mxu0
    %v746 = vadd.f32 0.0, %v745
    %v747 = vpop.f32.mrf.mxu0
    %v748 = vadd.f32 0.0, %v747
    %749 = vmatmul.bf16.gmra.mxu0 %v487
    %v750 = vpop.f32.mrf.mxu0
    %v751 = vadd.f32 0.0, %v750
    %v752 = vpop.f32.mrf.mxu0
    %v753 = vadd.f32 0.0, %v752
    %754 = vmatmul.bf16.gmra.mxu0 %v489
    %v755 = vpop.f32.mrf.mxu0
    %v756 = vadd.f32 0.0, %v755
    %v757 = vpop.f32.mrf.mxu0
    %v758 = vadd.f32 0.0, %v757
    %759 = vmatmul.bf16.gmra.mxu0 %v491
    %v760 = vpop.f32.mrf.mxu0
    %v761 = vadd.f32 0.0, %v760
    %v762 = vpop.f32.mrf.mxu0
    %v763 = vadd.f32 0.0, %v762
    %764 = vmatmul.bf16.gmra.mxu0 %v493
    %v765 = vpop.f32.mrf.mxu0
    %v766 = vadd.f32 0.0, %v765
    %v767 = vpop.f32.mrf.mxu0
    %v768 = vadd.f32 0.0, %v767
    %769 = vmatmul.bf16.gmra.mxu0 %v495
    %v770 = vpop.f32.mrf.mxu0
    %v771 = vadd.f32 0.0, %v770
    %v772 = vpop.f32.mrf.mxu0
    %v773 = vadd.f32 0.0, %v772
    %774 = vmatmul.bf16.gmra.mxu0 %v497
    %v775 = vpop.f32.mrf.mxu0
    %v776 = vadd.f32 0.0, %v775
    %v777 = vpop.f32.mrf.mxu0
    %v778 = vadd.f32 0.0, %v777
    %779 = vmatmul.bf16.gmra.mxu0 %v499
    %v780 = vpop.f32.mrf.mxu0
    %v781 = vadd.f32 0.0, %v780
    %v782 = vpop.f32.mrf.mxu0
    %v783 = vadd.f32 0.0, %v782
    %784 = vmatmul.bf16.gmra.mxu0 %v501
    %v785 = vpop.f32.mrf.mxu0
    %v786 = vadd.f32 0.0, %v785
    %v787 = vpop.f32.mrf.mxu0
    %v788 = vadd.f32 0.0, %v787
    %789 = vmatmul.bf16.gmra.mxu0 %v503
    %v790 = vpop.f32.mrf.mxu0
    %v791 = vadd.f32 0.0, %v790
    %v792 = vpop.f32.mrf.mxu0
    %v793 = vadd.f32 0.0, %v792
    %794 = vmatmul.bf16.gmra.mxu0 %v505
    %v795 = vpop.f32.mrf.mxu0
    %v796 = vadd.f32 0.0, %v795
    %v797 = vpop.f32.mrf.mxu0
    %v798 = vadd.f32 0.0, %v797
    %799 = vmatmul.bf16.gmra.mxu0 %v507
    %v800 = vpop.f32.mrf.mxu0
    %v801 = vadd.f32 0.0, %v800
    %v802 = vpop.f32.mrf.mxu0
    %v803 = vadd.f32 0.0, %v802
    %804 = vmatmul.bf16.gmra.mxu0 %v509
    %v805 = vpop.f32.mrf.mxu0
    %v806 = vadd.f32 0.0, %v805
    %v807 = vpop.f32.mrf.mxu0
    %v808 = vadd.f32 0.0, %v807
    %809 = vmatmul.bf16.gmra.mxu0 %v511
    %v810 = vpop.f32.mrf.mxu0
    %v811 = vadd.f32 0.0, %v810
    %v812 = vpop.f32.mrf.mxu0
    %v813 = vadd.f32 0.0, %v812
    %814 = vmatmul.bf16.gmra.mxu0 %v513
    %v815 = vpop.f32.mrf.mxu0
    %v816 = vadd.f32 0.0, %v815
    %v817 = vpop.f32.mrf.mxu0
    %v818 = vadd.f32 0.0, %v817
    %819 = vmatmul.bf16.gmra.mxu0 %v515
    %v820 = vpop.f32.mrf.mxu0
    %v821 = vadd.f32 0.0, %v820
    %v822 = vpop.f32.mrf.mxu0
    %v823 = vadd.f32 0.0, %v822
    %824 = vmatmul.bf16.gmra.mxu0 %v517
    %v825 = vpop.f32.mrf.mxu0
    %v826 = vadd.f32 0.0, %v825
    %v827 = vpop.f32.mrf.mxu0
    %v828 = vadd.f32 0.0, %v827
    %829 = vmatmul.bf16.gmra.mxu0 %v519
    %v830 = vpop.f32.mrf.mxu0
    %v831 = vadd.f32 0.0, %v830
    %v832 = vpop.f32.mrf.mxu0
    %v833 = vadd.f32 0.0, %v832
    %834 = vmatmul.bf16.gmra.mxu0 %v521
    %v835 = vpop.f32.mrf.mxu0
    %v836 = vadd.f32 0.0, %v835
    %v837 = vpop.f32.mrf.mxu0
    %v838 = vadd.f32 0.0, %v837
    %839 = vmatmul.bf16.gmra.mxu0 %v523
    %v840 = vpop.f32.mrf.mxu0
    %v841 = vadd.f32 0.0, %v840
    %v842 = vpop.f32.mrf.mxu0
    %v843 = vadd.f32 0.0, %v842
    %844 = vmatmul.bf16.gmra.mxu0 %v525
    %v845 = vpop.f32.mrf.mxu0
    %v846 = vadd.f32 0.0, %v845
    %v847 = vpop.f32.mrf.mxu0
    %v848 = vadd.f32 0.0, %v847
    %849 = vmatmul.bf16.gmra.mxu0 %v527
    %v850 = vpop.f32.mrf.mxu0
    %v851 = vadd.f32 0.0, %v850
    %v852 = vpop.f32.mrf.mxu0
    %v853 = vadd.f32 0.0, %v852
    %854 = vmatmul.bf16.gmra.mxu0 %v529
    %v855 = vpop.f32.mrf.mxu0
    %v856 = vadd.f32 0.0, %v855
    %v857 = vpop.f32.mrf.mxu0
    %v858 = vadd.f32 0.0, %v857
    %859 = vdwg.mxu0
    %860 = vmatpush.bf16.msra.mxu0 %v674
    %861 = vmatpush.bf16.msra.mxu0 %v673
    %862 = vmatpush.bf16.msra.mxu0 %v672
    %863 = vmatpush.bf16.msra.mxu0 %v671
    %864 = vmatpush.bf16.msra.mxu0 %v670
    %865 = vmatpush.bf16.msra.mxu0 %v669
    %866 = vmatpush.bf16.msra.mxu0 %v668
    %867 = vmatpush.bf16.msra.mxu0 %v667
    %868 = vmatmul.bf16.gmra.mxu0 %v468
    %v869 = vpop.f32.mrf.mxu0
    %v870 = vadd.f32 %v701, %v869
    %v871 = vpop.f32.mrf.mxu0
    %v872 = vadd.f32 %v703, %v871
    %873 = vmatmul.bf16.gmra.mxu0 %v470
    %v874 = vpop.f32.mrf.mxu0
    %v875 = vadd.f32 %v706, %v874
    %v876 = vpop.f32.mrf.mxu0
    %v877 = vadd.f32 %v708, %v876
    %878 = vmatmul.bf16.gmra.mxu0 %v472
    %v879 = vpop.f32.mrf.mxu0
    %v880 = vadd.f32 %v711, %v879
    %v881 = vpop.f32.mrf.mxu0
    %v882 = vadd.f32 %v713, %v881
    %883 = vmatmul.bf16.gmra.mxu0 %v474
    %v884 = vpop.f32.mrf.mxu0
    %v885 = vadd.f32 %v716, %v884
    %v886 = vpop.f32.mrf.mxu0
    %v887 = vadd.f32 %v718, %v886
    %888 = vmatmul.bf16.gmra.mxu0 %v476
    %v889 = vpop.f32.mrf.mxu0
    %v890 = vadd.f32 %v721, %v889
    %v891 = vpop.f32.mrf.mxu0
    %v892 = vadd.f32 %v723, %v891
    %893 = vmatmul.bf16.gmra.mxu0 %v478
    %v894 = vpop.f32.mrf.mxu0
    %v895 = vadd.f32 %v726, %v894
    %v896 = vpop.f32.mrf.mxu0
    %v897 = vadd.f32 %v728, %v896
    %898 = vmatmul.bf16.gmra.mxu0 %v480
    %v899 = vpop.f32.mrf.mxu0
    %v900 = vadd.f32 %v731, %v899
    %v901 = vpop.f32.mrf.mxu0
    %v902 = vadd.f32 %v733, %v901
    %903 = vmatmul.bf16.gmra.mxu0 %v482
    %v904 = vpop.f32.mrf.mxu0
    %v905 = vadd.f32 %v736, %v904
    %v906 = vpop.f32.mrf.mxu0
    %v907 = vadd.f32 %v738, %v906
    %908 = vmatmul.bf16.gmra.mxu0 %v484
    %v909 = vpop.f32.mrf.mxu0
    %v910 = vadd.f32 %v741, %v909
    %v911 = vpop.f32.mrf.mxu0
    %v912 = vadd.f32 %v743, %v911
    %913 = vmatmul.bf16.gmra.mxu0 %v486
    %v914 = vpop.f32.mrf.mxu0
    %v915 = vadd.f32 %v746, %v914
    %v916 = vpop.f32.mrf.mxu0
    %v917 = vadd.f32 %v748, %v916
    %918 = vmatmul.bf16.gmra.mxu0 %v488
    %v919 = vpop.f32.mrf.mxu0
    %v920 = vadd.f32 %v751, %v919
    %v921 = vpop.f32.mrf.mxu0
    %v922 = vadd.f32 %v753, %v921
    %923 = vmatmul.bf16.gmra.mxu0 %v490
    %v924 = vpop.f32.mrf.mxu0
    %v925 = vadd.f32 %v756, %v924
    %v926 = vpop.f32.mrf.mxu0
    %v927 = vadd.f32 %v758, %v926
    %928 = vmatmul.bf16.gmra.mxu0 %v492
    %v929 = vpop.f32.mrf.mxu0
    %v930 = vadd.f32 %v761, %v929
    %v931 = vpop.f32.mrf.mxu0
    %v932 = vadd.f32 %v763, %v931
    %933 = vmatmul.bf16.gmra.mxu0 %v494
    %v934 = vpop.f32.mrf.mxu0
    %v935 = vadd.f32 %v766, %v934
    %v936 = vpop.f32.mrf.mxu0
    %v937 = vadd.f32 %v768, %v936
    %938 = vmatmul.bf16.gmra.mxu0 %v496
    %v939 = vpop.f32.mrf.mxu0
    %v940 = vadd.f32 %v771, %v939
    %v941 = vpop.f32.mrf.mxu0
    %v942 = vadd.f32 %v773, %v941
    %943 = vmatmul.bf16.gmra.mxu0 %v498
    %v944 = vpop.f32.mrf.mxu0
    %v945 = vadd.f32 %v776, %v944
    %v946 = vpop.f32.mrf.mxu0
    %v947 = vadd.f32 %v778, %v946
    %948 = vmatmul.bf16.gmra.mxu0 %v500
    %v949 = vpop.f32.mrf.mxu0
    %v950 = vadd.f32 %v781, %v949
    %v951 = vpop.f32.mrf.mxu0
    %v952 = vadd.f32 %v783, %v951
    %953 = vmatmul.bf16.gmra.mxu0 %v502
    %v954 = vpop.f32.mrf.mxu0
    %v955 = vadd.f32 %v786, %v954
    %v956 = vpop.f32.mrf.mxu0
    %v957 = vadd.f32 %v788, %v956
    %958 = vmatmul.bf16.gmra.mxu0 %v504
    %v959 = vpop.f32.mrf.mxu0
    %v960 = vadd.f32 %v791, %v959
    %v961 = vpop.f32.mrf.mxu0
    %v962 = vadd.f32 %v793, %v961
    %963 = vmatmul.bf16.gmra.mxu0 %v506
    %v964 = vpop.f32.mrf.mxu0
    %v965 = vadd.f32 %v796, %v964
    %v966 = vpop.f32.mrf.mxu0
    %v967 = vadd.f32 %v798, %v966
    %968 = vmatmul.bf16.gmra.mxu0 %v508
    %v969 = vpop.f32.mrf.mxu0
    %v970 = vadd.f32 %v801, %v969
    %v971 = vpop.f32.mrf.mxu0
    %v972 = vadd.f32 %v803, %v971
    %973 = vmatmul.bf16.gmra.mxu0 %v510
    %v974 = vpop.f32.mrf.mxu0
    %v975 = vadd.f32 %v806, %v974
    %v976 = vpop.f32.mrf.mxu0
    %v977 = vadd.f32 %v808, %v976
    %978 = vmatmul.bf16.gmra.mxu0 %v512
    %v979 = vpop.f32.mrf.mxu0
    %v980 = vadd.f32 %v811, %v979
    %v981 = vpop.f32.mrf.mxu0
    %v982 = vadd.f32 %v813, %v981
    %983 = vmatmul.bf16.gmra.mxu0 %v514
    %v984 = vpop.f32.mrf.mxu0
    %v985 = vadd.f32 %v816, %v984
    %v986 = vpop.f32.mrf.mxu0
    %v987 = vadd.f32 %v818, %v986
    %988 = vmatmul.bf16.gmra.mxu0 %v516
    %v989 = vpop.f32.mrf.mxu0
    %v990 = vadd.f32 %v821, %v989
    %v991 = vpop.f32.mrf.mxu0
    %v992 = vadd.f32 %v823, %v991
    %993 = vmatmul.bf16.gmra.mxu0 %v518
    %v994 = vpop.f32.mrf.mxu0
    %v995 = vadd.f32 %v826, %v994
    %v996 = vpop.f32.mrf.mxu0
    %v997 = vadd.f32 %v828, %v996
    %998 = vmatmul.bf16.gmra.mxu0 %v520
    %v999 = vpop.f32.mrf.mxu0
    %v1000 = vadd.f32 %v831, %v999
    %v1001 = vpop.f32.mrf.mxu0
    %v1002 = vadd.f32 %v833, %v1001
    %1003 = vmatmul.bf16.gmra.mxu0 %v522
    %v1004 = vpop.f32.mrf.mxu0
    %v1005 = vadd.f32 %v836, %v1004
    %v1006 = vpop.f32.mrf.mxu0
    %v1007 = vadd.f32 %v838, %v1006
    %1008 = vmatmul.bf16.gmra.mxu0 %v524
    %v1009 = vpop.f32.mrf.mxu0
    %v1010 = vadd.f32 %v841, %v1009
    %v1011 = vpop.f32.mrf.mxu0
    %v1012 = vadd.f32 %v843, %v1011
    %1013 = vmatmul.bf16.gmra.mxu0 %v526
    %v1014 = vpop.f32.mrf.mxu0
    %v1015 = vadd.f32 %v846, %v1014
    %v1016 = vpop.f32.mrf.mxu0
    %v1017 = vadd.f32 %v848, %v1016
    %1018 = vmatmul.bf16.gmra.mxu0 %v528
    %v1019 = vpop.f32.mrf.mxu0
    %v1020 = vadd.f32 %v851, %v1019
    %v1021 = vpop.f32.mrf.mxu0
    %v1022 = vadd.f32 %v853, %v1021
    %1023 = vmatmul.bf16.gmra.mxu0 %v530
    %v1024 = vpop.f32.mrf.mxu0
    %v1025 = vadd.f32 %v856, %v1024
    %v1026 = vpop.f32.mrf.mxu0
    %v1027 = vadd.f32 %v858, %v1026
    %1028 = vdwg.mxu0
    %v1029 = vadd.f32 %v115, %v870
    %v1030 = vadd.f32 %v116, %v872
    %v1031 = vadd.f32 %v117, %v875
    %v1032 = vadd.f32 %v118, %v877
    %v1033 = vadd.f32 %v119, %v880
    %v1034 = vadd.f32 %v120, %v882
    %v1035 = vadd.f32 %v121, %v885
    %v1036 = vadd.f32 %v122, %v887
    %v1037 = vadd.f32 %v123, %v890
    %v1038 = vadd.f32 %v124, %v892
    %v1039 = vadd.f32 %v125, %v895
    %v1040 = vadd.f32 %v126, %v897
    %v1041 = vadd.f32 %v127, %v900
    %v1042 = vadd.f32 %v128, %v902
    %v1043 = vadd.f32 %v129, %v905
    %v1044 = vadd.f32 %v130, %v907
    %v1045 = vadd.f32 %v131, %v910
    %v1046 = vadd.f32 %v132, %v912
    %v1047 = vadd.f32 %v133, %v915
    %v1048 = vadd.f32 %v134, %v917
    %v1049 = vadd.f32 %v135, %v920
    %v1050 = vadd.f32 %v136, %v922
    %v1051 = vadd.f32 %v137, %v925
    %v1052 = vadd.f32 %v138, %v927
    %v1053 = vadd.f32 %v139, %v930
    %v1054 = vadd.f32 %v140, %v932
    %v1055 = vadd.f32 %v141, %v935
    %v1056 = vadd.f32 %v142, %v937
    %v1057 = vadd.f32 %v143, %v940
    %v1058 = vadd.f32 %v144, %v942
    %v1059 = vadd.f32 %v145, %v945
    %v1060 = vadd.f32 %v146, %v947
    %v1061 = vadd.f32 %v147, %v950
    %v1062 = vadd.f32 %v148, %v952
    %v1063 = vadd.f32 %v149, %v955
    %v1064 = vadd.f32 %v150, %v957
    %v1065 = vadd.f32 %v151, %v960
    %v1066 = vadd.f32 %v152, %v962
    %v1067 = vadd.f32 %v153, %v965
    %v1068 = vadd.f32 %v154, %v967
    %v1069 = vadd.f32 %v155, %v970
    %v1070 = vadd.f32 %v156, %v972
    %v1071 = vadd.f32 %v157, %v975
    %v1072 = vadd.f32 %v158, %v977
    %v1073 = vadd.f32 %v159, %v980
    %v1074 = vadd.f32 %v160, %v982
    %v1075 = vadd.f32 %v161, %v985
    %v1076 = vadd.f32 %v162, %v987
    %v1077 = vadd.f32 %v163, %v990
    %v1078 = vadd.f32 %v164, %v992
    %v1079 = vadd.f32 %v165, %v995
    %v1080 = vadd.f32 %v166, %v997
    %v1081 = vadd.f32 %v167, %v1000
    %v1082 = vadd.f32 %v168, %v1002
    %v1083 = vadd.f32 %v169, %v1005
    %v1084 = vadd.f32 %v170, %v1007
    %v1085 = vadd.f32 %v171, %v1010
    %v1086 = vadd.f32 %v172, %v1012
    %v1087 = vadd.f32 %v173, %v1015
    %v1088 = vadd.f32 %v174, %v1017
    %v1089 = vadd.f32 %v175, %v1020
    %v1090 = vadd.f32 %v176, %v1022
    %v1091 = vadd.f32 %v177, %v1025
    %v1092 = vadd.f32 %v178, %v1027
    %1093 = vst [vmem:[#allocation2] sm:$0xff] %v1029
    %1094 = vst [vmem:[#allocation2 + $0x8] sm:$0xff] %v1030
    %1095 = vst [vmem:[#allocation2 + $0x10] sm:$0xff] %v1031
    %1096 = vst [vmem:[#allocation2 + $0x18] sm:$0xff] %v1032
    %1097 = vst [vmem:[#allocation2 + $0x20] sm:$0xff] %v1033
    %1098 = vst [vmem:[#allocation2 + $0x28] sm:$0xff] %v1034
    %1099 = vst [vmem:[#allocation2 + $0x30] sm:$0xff] %v1035
    %1100 = vst [vmem:[#allocation2 + $0x38] sm:$0xff] %v1036
    %1101 = vst [vmem:[#allocation2 + $0x40] sm:$0xff] %v1037
    %1102 = vst [vmem:[#allocation2 + $0x48] sm:$0xff] %v1038
    %1103 = vst [vmem:[#allocation2 + $0x50] sm:$0xff] %v1039
    %1104 = vst [vmem:[#allocation2 + $0x58] sm:$0xff] %v1040
    %1105 = vst [vmem:[#allocation2 + $0x60] sm:$0xff] %v1041
    %1106 = vst [vmem:[#allocation2 + $0x68] sm:$0xff] %v1042
    %1107 = vst [vmem:[#allocation2 + $0x70] sm:$0xff] %v1043
    %1108 = vst [vmem:[#allocation2 + $0x78] sm:$0xff] %v1044
    %1109 = vst [vmem:[#allocation2 + $0x80] sm:$0xff] %v1045
    %1110 = vst [vmem:[#allocation2 + $0x88] sm:$0xff] %v1046
    %1111 = vst [vmem:[#allocation2 + $0x90] sm:$0xff] %v1047
    %1112 = vst [vmem:[#allocation2 + $0x98] sm:$0xff] %v1048
    %1113 = vst [vmem:[#allocation2 + $0xa0] sm:$0xff] %v1049
    %1114 = vst [vmem:[#allocation2 + $0xa8] sm:$0xff] %v1050
    %1115 = vst [vmem:[#allocation2 + $0xb0] sm:$0xff] %v1051
    %1116 = vst [vmem:[#allocation2 + $0xb8] sm:$0xff] %v1052
    %1117 = vst [vmem:[#allocation2 + $0xc0] sm:$0xff] %v1053
    %1118 = vst [vmem:[#allocation2 + $0xc8] sm:$0xff] %v1054
    %1119 = vst [vmem:[#allocation2 + $0xd0] sm:$0xff] %v1055
    %1120 = vst [vmem:[#allocation2 + $0xd8] sm:$0xff] %v1056
    %1121 = vst [vmem:[#allocation2 + $0xe0] sm:$0xff] %v1057
    %1122 = vst [vmem:[#allocation2 + $0xe8] sm:$0xff] %v1058
    %1123 = vst [vmem:[#allocation2 + $0xf0] sm:$0xff] %v1059
    %1124 = vst [vmem:[#allocation2 + $0xf8] sm:$0xff] %v1060
    %1125 = vst [vmem:[#allocation2 + $0x100] sm:$0xff] %v1061
    %1126 = vst [vmem:[#allocation2 + $0x108] sm:$0xff] %v1062
    %1127 = vst [vmem:[#allocation2 + $0x110] sm:$0xff] %v1063
    %1128 = vst [vmem:[#allocation2 + $0x118] sm:$0xff] %v1064
    %1129 = vst [vmem:[#allocation2 + $0x120] sm:$0xff] %v1065
    %1130 = vst [vmem:[#allocation2 + $0x128] sm:$0xff] %v1066
    %1131 = vst [vmem:[#allocation2 + $0x130] sm:$0xff] %v1067
    %1132 = vst [vmem:[#allocation2 + $0x138] sm:$0xff] %v1068
    %1133 = vst [vmem:[#allocation2 + $0x140] sm:$0xff] %v1069
    %1134 = vst [vmem:[#allocation2 + $0x148] sm:$0xff] %v1070
    %1135 = vst [vmem:[#allocation2 + $0x150] sm:$0xff] %v1071
    %1136 = vst [vmem:[#allocation2 + $0x158] sm:$0xff] %v1072
    %1137 = vst [vmem:[#allocation2 + $0x160] sm:$0xff] %v1073
    %1138 = vst [vmem:[#allocation2 + $0x168] sm:$0xff] %v1074
    %1139 = vst [vmem:[#allocation2 + $0x170] sm:$0xff] %v1075
    %1140 = vst [vmem:[#allocation2 + $0x178] sm:$0xff] %v1076
    %1141 = vst [vmem:[#allocation2 + $0x180] sm:$0xff] %v1077
    %1142 = vst [vmem:[#allocation2 + $0x188] sm:$0xff] %v1078
    %1143 = vst [vmem:[#allocation2 + $0x190] sm:$0xff] %v1079
    %1144 = vst [vmem:[#allocation2 + $0x198] sm:$0xff] %v1080
    %1145 = vst [vmem:[#allocation2 + $0x1a0] sm:$0xff] %v1081
    %1146 = vst [vmem:[#allocation2 + $0x1a8] sm:$0xff] %v1082
    %1147 = vst [vmem:[#allocation2 + $0x1b0] sm:$0xff] %v1083
    %1148 = vst [vmem:[#allocation2 + $0x1b8] sm:$0xff] %v1084
    %1149 = vst [vmem:[#allocation2 + $0x1c0] sm:$0xff] %v1085
    %1150 = vst [vmem:[#allocation2 + $0x1c8] sm:$0xff] %v1086
    %1151 = vst [vmem:[#allocation2 + $0x1d0] sm:$0xff] %v1087
    %1152 = vst [vmem:[#allocation2 + $0x1d8] sm:$0xff] %v1088
    %1153 = vst [vmem:[#allocation2 + $0x1e0] sm:$0xff] %v1089
    %1154 = vst [vmem:[#allocation2 + $0x1e8] sm:$0xff] %v1090
    %1155 = vst [vmem:[#allocation2 + $0x1f0] sm:$0xff] %v1091
    %1156 = vst [vmem:[#allocation2 + $0x1f8] sm:$0xff] %v1092
    // Predicated region
    $region26: #{tpu_custom_call.1} parent=1 // pred_check
      %p1157 = pneg %p47
    $region27: #{tpu_custom_call.1} parent=1 // pred_check_branch
      %1159 = sbr.rel (%p1157) target = $region29
    $region28: #{tpu_custom_call.1} parent=1 // pred_region
      %v1160 = vld [vmem:[#allocation2] sm:$0xff]
      %v1161 = vld [vmem:[#allocation2 + $0x8] sm:$0xff]
      %v1162 = vld [vmem:[#allocation2 + $0x10] sm:$0xff]
      %v1163 = vld [vmem:[#allocation2 + $0x18] sm:$0xff]
      %v1164 = vld [vmem:[#allocation2 + $0x20] sm:$0xff]
      %v1165 = vld [vmem:[#allocation2 + $0x28] sm:$0xff]
      %v1166 = vld [vmem:[#allocation2 + $0x30] sm:$0xff]
      %v1167 = vld [vmem:[#allocation2 + $0x38] sm:$0xff]
      %v1168 = vld [vmem:[#allocation2 + $0x40] sm:$0xff]
      %v1169 = vld [vmem:[#allocation2 + $0x48] sm:$0xff]
      %v1170 = vld [vmem:[#allocation2 + $0x50] sm:$0xff]
      %v1171 = vld [vmem:[#allocation2 + $0x58] sm:$0xff]
      %v1172 = vld [vmem:[#allocation2 + $0x60] sm:$0xff]
      %v1173 = vld [vmem:[#allocation2 + $0x68] sm:$0xff]
      %v1174 = vld [vmem:[#allocation2 + $0x70] sm:$0xff]
      %v1175 = vld [vmem:[#allocation2 + $0x78] sm:$0xff]
      %v1176 = vld [vmem:[#allocation2 + $0x80] sm:$0xff]
      %v1177 = vld [vmem:[#allocation2 + $0x88] sm:$0xff]
      %v1178 = vld [vmem:[#allocation2 + $0x90] sm:$0xff]
      %v1179 = vld [vmem:[#allocation2 + $0x98] sm:$0xff]
      %v1180 = vld [vmem:[#allocation2 + $0xa0] sm:$0xff]
      %v1181 = vld [vmem:[#allocation2 + $0xa8] sm:$0xff]
      %v1182 = vld [vmem:[#allocation2 + $0xb0] sm:$0xff]
      %v1183 = vld [vmem:[#allocation2 + $0xb8] sm:$0xff]
      %v1184 = vld [vmem:[#allocation2 + $0xc0] sm:$0xff]
      %v1185 = vld [vmem:[#allocation2 + $0xc8] sm:$0xff]
      %v1186 = vld [vmem:[#allocation2 + $0xd0] sm:$0xff]
      %v1187 = vld [vmem:[#allocation2 + $0xd8] sm:$0xff]
      %v1188 = vld [vmem:[#allocation2 + $0xe0] sm:$0xff]
      %v1189 = vld [vmem:[#allocation2 + $0xe8] sm:$0xff]
      %v1190 = vld [vmem:[#allocation2 + $0xf0] sm:$0xff]
      %v1191 = vld [vmem:[#allocation2 + $0xf8] sm:$0xff]
      %v1192 = vld [vmem:[#allocation2 + $0x100] sm:$0xff]
      %v1193 = vld [vmem:[#allocation2 + $0x108] sm:$0xff]
      %v1194 = vld [vmem:[#allocation2 + $0x110] sm:$0xff]
      %v1195 = vld [vmem:[#allocation2 + $0x118] sm:$0xff]
      %v1196 = vld [vmem:[#allocation2 + $0x120] sm:$0xff]
      %v1197 = vld [vmem:[#allocation2 + $0x128] sm:$0xff]
      %v1198 = vld [vmem:[#allocation2 + $0x130] sm:$0xff]
      %v1199 = vld [vmem:[#allocation2 + $0x138] sm:$0xff]
      %v1200 = vld [vmem:[#allocation2 + $0x140] sm:$0xff]
      %v1201 = vld [vmem:[#allocation2 + $0x148] sm:$0xff]
      %v1202 = vld [vmem:[#allocation2 + $0x150] sm:$0xff]
      %v1203 = vld [vmem:[#allocation2 + $0x158] sm:$0xff]
      %v1204 = vld [vmem:[#allocation2 + $0x160] sm:$0xff]
      %v1205 = vld [vmem:[#allocation2 + $0x168] sm:$0xff]
      %v1206 = vld [vmem:[#allocation2 + $0x170] sm:$0xff]
      %v1207 = vld [vmem:[#allocation2 + $0x178] sm:$0xff]
      %v1208 = vld [vmem:[#allocation2 + $0x180] sm:$0xff]
      %v1209 = vld [vmem:[#allocation2 + $0x188] sm:$0xff]
      %v1210 = vld [vmem:[#allocation2 + $0x190] sm:$0xff]
      %v1211 = vld [vmem:[#allocation2 + $0x198] sm:$0xff]
      %v1212 = vld [vmem:[#allocation2 + $0x1a0] sm:$0xff]
      %v1213 = vld [vmem:[#allocation2 + $0x1a8] sm:$0xff]
      %v1214 = vld [vmem:[#allocation2 + $0x1b0] sm:$0xff]
      %v1215 = vld [vmem:[#allocation2 + $0x1b8] sm:$0xff]
      %v1216 = vld [vmem:[#allocation2 + $0x1c0] sm:$0xff]
      %v1217 = vld [vmem:[#allocation2 + $0x1c8] sm:$0xff]
      %v1218 = vld [vmem:[#allocation2 + $0x1d0] sm:$0xff]
      %v1219 = vld [vmem:[#allocation2 + $0x1d8] sm:$0xff]
      %v1220 = vld [vmem:[#allocation2 + $0x1e0] sm:$0xff]
      %v1221 = vld [vmem:[#allocation2 + $0x1e8] sm:$0xff]
      %v1222 = vld [vmem:[#allocation2 + $0x1f0] sm:$0xff]
      %v1223 = vld [vmem:[#allocation2 + $0x1f8] sm:$0xff]
      %v1224 = vld [vmem:[%s2] sm:$0x1]
      %v1226 = vperm.slane %v1224, 0
      %v1228 = vadd.f32 %v1160, %v1226
      %v1229 = vadd.f32 %v1161, %v1226
      %v1230 = vadd.f32 %v1162, %v1226
      %v1231 = vadd.f32 %v1163, %v1226
      %v1232 = vadd.f32 %v1164, %v1226
      %v1233 = vadd.f32 %v1165, %v1226
      %v1234 = vadd.f32 %v1166, %v1226
      %v1235 = vadd.f32 %v1167, %v1226
      %v1236 = vadd.f32 %v1168, %v1226
      %v1237 = vadd.f32 %v1169, %v1226
      %v1238 = vadd.f32 %v1170, %v1226
      %v1239 = vadd.f32 %v1171, %v1226
      %v1240 = vadd.f32 %v1172, %v1226
      %v1241 = vadd.f32 %v1173, %v1226
      %v1242 = vadd.f32 %v1174, %v1226
      %v1243 = vadd.f32 %v1175, %v1226
      %v1244 = vadd.f32 %v1176, %v1226
      %v1245 = vadd.f32 %v1177, %v1226
      %v1246 = vadd.f32 %v1178, %v1226
      %v1247 = vadd.f32 %v1179, %v1226
      %v1248 = vadd.f32 %v1180, %v1226
      %v1249 = vadd.f32 %v1181, %v1226
      %v1250 = vadd.f32 %v1182, %v1226
      %v1251 = vadd.f32 %v1183, %v1226
      %v1252 = vadd.f32 %v1184, %v1226
      %v1253 = vadd.f32 %v1185, %v1226
      %v1254 = vadd.f32 %v1186, %v1226
      %v1255 = vadd.f32 %v1187, %v1226
      %v1256 = vadd.f32 %v1188, %v1226
      %v1257 = vadd.f32 %v1189, %v1226
      %v1258 = vadd.f32 %v1190, %v1226
      %v1259 = vadd.f32 %v1191, %v1226
      %v1260 = vadd.f32 %v1192, %v1226
      %v1261 = vadd.f32 %v1193, %v1226
      %v1262 = vadd.f32 %v1194, %v1226
      %v1263 = vadd.f32 %v1195, %v1226
      %v1264 = vadd.f32 %v1196, %v1226
      %v1265 = vadd.f32 %v1197, %v1226
      %v1266 = vadd.f32 %v1198, %v1226
      %v1267 = vadd.f32 %v1199, %v1226
      %v1268 = vadd.f32 %v1200, %v1226
      %v1269 = vadd.f32 %v1201, %v1226
      %v1270 = vadd.f32 %v1202, %v1226
      %v1271 = vadd.f32 %v1203, %v1226
      %v1272 = vadd.f32 %v1204, %v1226
      %v1273 = vadd.f32 %v1205, %v1226
      %v1274 = vadd.f32 %v1206, %v1226
      %v1275 = vadd.f32 %v1207, %v1226
      %v1276 = vadd.f32 %v1208, %v1226
      %v1277 = vadd.f32 %v1209, %v1226
      %v1278 = vadd.f32 %v1210, %v1226
      %v1279 = vadd.f32 %v1211, %v1226
      %v1280 = vadd.f32 %v1212, %v1226
      %v1281 = vadd.f32 %v1213, %v1226
      %v1282 = vadd.f32 %v1214, %v1226
      %v1283 = vadd.f32 %v1215, %v1226
      %v1284 = vadd.f32 %v1216, %v1226
      %v1285 = vadd.f32 %v1217, %v1226
      %v1286 = vadd.f32 %v1218, %v1226
      %v1287 = vadd.f32 %v1219, %v1226
      %v1288 = vadd.f32 %v1220, %v1226
      %v1289 = vadd.f32 %v1221, %v1226
      %v1290 = vadd.f32 %v1222, %v1226
      %v1291 = vadd.f32 %v1223, %v1226
      %v1292 = vmax.f32 %v1228, 0.0
      %v1293 = vmax.f32 %v1229, 0.0
      %v1294 = vmax.f32 %v1230, 0.0
      %v1295 = vmax.f32 %v1231, 0.0
      %v1296 = vmax.f32 %v1232, 0.0
      %v1297 = vmax.f32 %v1233, 0.0
      %v1298 = vmax.f32 %v1234, 0.0
      %v1299 = vmax.f32 %v1235, 0.0
      %v1300 = vmax.f32 %v1236, 0.0
      %v1301 = vmax.f32 %v1237, 0.0
      %v1302 = vmax.f32 %v1238, 0.0
      %v1303 = vmax.f32 %v1239, 0.0
      %v1304 = vmax.f32 %v1240, 0.0
      %v1305 = vmax.f32 %v1241, 0.0
      %v1306 = vmax.f32 %v1242, 0.0
      %v1307 = vmax.f32 %v1243, 0.0
      %v1308 = vmax.f32 %v1244, 0.0
      %v1309 = vmax.f32 %v1245, 0.0
      %v1310 = vmax.f32 %v1246, 0.0
      %v1311 = vmax.f32 %v1247, 0.0
      %v1312 = vmax.f32 %v1248, 0.0
      %v1313 = vmax.f32 %v1249, 0.0
      %v1314 = vmax.f32 %v1250, 0.0
      %v1315 = vmax.f32 %v1251, 0.0
      %v1316 = vmax.f32 %v1252, 0.0
      %v1317 = vmax.f32 %v1253, 0.0
      %v1318 = vmax.f32 %v1254, 0.0
      %v1319 = vmax.f32 %v1255, 0.0
      %v1320 = vmax.f32 %v1256, 0.0
      %v1321 = vmax.f32 %v1257, 0.0
      %v1322 = vmax.f32 %v1258, 0.0
      %v1323 = vmax.f32 %v1259, 0.0
      %v1324 = vmax.f32 %v1260, 0.0
      %v1325 = vmax.f32 %v1261, 0.0
      %v1326 = vmax.f32 %v1262, 0.0
      %v1327 = vmax.f32 %v1263, 0.0
      %v1328 = vmax.f32 %v1264, 0.0
      %v1329 = vmax.f32 %v1265, 0.0
      %v1330 = vmax.f32 %v1266, 0.0
      %v1331 = vmax.f32 %v1267, 0.0
      %v1332 = vmax.f32 %v1268, 0.0
      %v1333 = vmax.f32 %v1269, 0.0
      %v1334 = vmax.f32 %v1270, 0.0
      %v1335 = vmax.f32 %v1271, 0.0
      %v1336 = vmax.f32 %v1272, 0.0
      %v1337 = vmax.f32 %v1273, 0.0
      %v1338 = vmax.f32 %v1274, 0.0
      %v1339 = vmax.f32 %v1275, 0.0
      %v1340 = vmax.f32 %v1276, 0.0
      %v1341 = vmax.f32 %v1277, 0.0
      %v1342 = vmax.f32 %v1278, 0.0
      %v1343 = vmax.f32 %v1279, 0.0
      %v1344 = vmax.f32 %v1280, 0.0
      %v1345 = vmax.f32 %v1281, 0.0
      %v1346 = vmax.f32 %v1282, 0.0
      %v1347 = vmax.f32 %v1283, 0.0
      %v1348 = vmax.f32 %v1284, 0.0
      %v1349 = vmax.f32 %v1285, 0.0
      %v1350 = vmax.f32 %v1286, 0.0
      %v1351 = vmax.f32 %v1287, 0.0
      %v1352 = vmax.f32 %v1288, 0.0
      %v1353 = vmax.f32 %v1289, 0.0
      %v1354 = vmax.f32 %v1290, 0.0
      %v1355 = vmax.f32 %v1291, 0.0
      %v1356 = vpack.c.bf16 %v1292, %v1292
      %v1357 = vpack.c.bf16 %v1293, %v1293
      %v1358 = vpack.c.bf16 %v1294, %v1294
      %v1359 = vpack.c.bf16 %v1295, %v1295
      %v1360 = vpack.c.bf16 %v1296, %v1296
      %v1361 = vpack.c.bf16 %v1297, %v1297
      %v1362 = vpack.c.bf16 %v1298, %v1298
      %v1363 = vpack.c.bf16 %v1299, %v1299
      %v1364 = vpack.c.bf16 %v1300, %v1300
      %v1365 = vpack.c.bf16 %v1301, %v1301
      %v1366 = vpack.c.bf16 %v1302, %v1302
      %v1367 = vpack.c.bf16 %v1303, %v1303
      %v1368 = vpack.c.bf16 %v1304, %v1304
      %v1369 = vpack.c.bf16 %v1305, %v1305
      %v1370 = vpack.c.bf16 %v1306, %v1306
      %v1371 = vpack.c.bf16 %v1307, %v1307
      %v1372 = vpack.c.bf16 %v1308, %v1308
      %v1373 = vpack.c.bf16 %v1309, %v1309
      %v1374 = vpack.c.bf16 %v1310, %v1310
      %v1375 = vpack.c.bf16 %v1311, %v1311
      %v1376 = vpack.c.bf16 %v1312, %v1312
      %v1377 = vpack.c.bf16 %v1313, %v1313
      %v1378 = vpack.c.bf16 %v1314, %v1314
      %v1379 = vpack.c.bf16 %v1315, %v1315
      %v1380 = vpack.c.bf16 %v1316, %v1316
      %v1381 = vpack.c.bf16 %v1317, %v1317
      %v1382 = vpack.c.bf16 %v1318, %v1318
      %v1383 = vpack.c.bf16 %v1319, %v1319
      %v1384 = vpack.c.bf16 %v1320, %v1320
      %v1385 = vpack.c.bf16 %v1321, %v1321
      %v1386 = vpack.c.bf16 %v1322, %v1322
      %v1387 = vpack.c.bf16 %v1323, %v1323
      %v1388 = vpack.c.bf16 %v1324, %v1324
      %v1389 = vpack.c.bf16 %v1325, %v1325
      %v1390 = vpack.c.bf16 %v1326, %v1326
      %v1391 = vpack.c.bf16 %v1327, %v1327
      %v1392 = vpack.c.bf16 %v1328, %v1328
      %v1393 = vpack.c.bf16 %v1329, %v1329
      %v1394 = vpack.c.bf16 %v1330, %v1330
      %v1395 = vpack.c.bf16 %v1331, %v1331
      %v1396 = vpack.c.bf16 %v1332, %v1332
      %v1397 = vpack.c.bf16 %v1333, %v1333
      %v1398 = vpack.c.bf16 %v1334, %v1334
      %v1399 = vpack.c.bf16 %v1335, %v1335
      %v1400 = vpack.c.bf16 %v1336, %v1336
      %v1401 = vpack.c.bf16 %v1337, %v1337
      %v1402 = vpack.c.bf16 %v1338, %v1338
      %v1403 = vpack.c.bf16 %v1339, %v1339
      %v1404 = vpack.c.bf16 %v1340, %v1340
      %v1405 = vpack.c.bf16 %v1341, %v1341
      %v1406 = vpack.c.bf16 %v1342, %v1342
      %v1407 = vpack.c.bf16 %v1343, %v1343
      %v1408 = vpack.c.bf16 %v1344, %v1344
      %v1409 = vpack.c.bf16 %v1345, %v1345
      %v1410 = vpack.c.bf16 %v1346, %v1346
      %v1411 = vpack.c.bf16 %v1347, %v1347
      %v1412 = vpack.c.bf16 %v1348, %v1348
      %v1413 = vpack.c.bf16 %v1349, %v1349
      %v1414 = vpack.c.bf16 %v1350, %v1350
      %v1415 = vpack.c.bf16 %v1351, %v1351
      %v1416 = vpack.c.bf16 %v1352, %v1352
      %v1417 = vpack.c.bf16 %v1353, %v1353
      %v1418 = vpack.c.bf16 %v1354, %v1354
      %v1419 = vpack.c.bf16 %v1355, %v1355
      %1420 = vst [vmem:[#allocation8] sm:$0xf] %v1356
      %1421 = vst [vmem:[#allocation8 + $0x4] sm:$0xf] %v1357
      %1422 = vst [vmem:[#allocation8 + $0x8] sm:$0xf] %v1358
      %1423 = vst [vmem:[#allocation8 + $0xc] sm:$0xf] %v1359
      %1424 = vst [vmem:[#allocation8 + $0x10] sm:$0xf] %v1360
      %1425 = vst [vmem:[#allocation8 + $0x14] sm:$0xf] %v1361
      %1426 = vst [vmem:[#allocation8 + $0x18] sm:$0xf] %v1362
      %1427 = vst [vmem:[#allocation8 + $0x1c] sm:$0xf] %v1363
      %1428 = vst [vmem:[#allocation8 + $0x20] sm:$0xf] %v1364
      %1429 = vst [vmem:[#allocation8 + $0x24] sm:$0xf] %v1365
      %1430 = vst [vmem:[#allocation8 + $0x28] sm:$0xf] %v1366
      %1431 = vst [vmem:[#allocation8 + $0x2c] sm:$0xf] %v1367
      %1432 = vst [vmem:[#allocation8 + $0x30] sm:$0xf] %v1368
      %1433 = vst [vmem:[#allocation8 + $0x34] sm:$0xf] %v1369
      %1434 = vst [vmem:[#allocation8 + $0x38] sm:$0xf] %v1370
      %1435 = vst [vmem:[#allocation8 + $0x3c] sm:$0xf] %v1371
      %1436 = vst [vmem:[#allocation8 + $0x40] sm:$0xf] %v1372
      %1437 = vst [vmem:[#allocation8 + $0x44] sm:$0xf] %v1373
      %1438 = vst [vmem:[#allocation8 + $0x48] sm:$0xf] %v1374
      %1439 = vst [vmem:[#allocation8 + $0x4c] sm:$0xf] %v1375
      %1440 = vst [vmem:[#allocation8 + $0x50] sm:$0xf] %v1376
      %1441 = vst [vmem:[#allocation8 + $0x54] sm:$0xf] %v1377
      %1442 = vst [vmem:[#allocation8 + $0x58] sm:$0xf] %v1378
      %1443 = vst [vmem:[#allocation8 + $0x5c] sm:$0xf] %v1379
      %1444 = vst [vmem:[#allocation8 + $0x60] sm:$0xf] %v1380
      %1445 = vst [vmem:[#allocation8 + $0x64] sm:$0xf] %v1381
      %1446 = vst [vmem:[#allocation8 + $0x68] sm:$0xf] %v1382
      %1447 = vst [vmem:[#allocation8 + $0x6c] sm:$0xf] %v1383
      %1448 = vst [vmem:[#allocation8 + $0x70] sm:$0xf] %v1384
      %1449 = vst [vmem:[#allocation8 + $0x74] sm:$0xf] %v1385
      %1450 = vst [vmem:[#allocation8 + $0x78] sm:$0xf] %v1386
      %1451 = vst [vmem:[#allocation8 + $0x7c] sm:$0xf] %v1387
      %1452 = vst [vmem:[#allocation8 + $0x80] sm:$0xf] %v1388
      %1453 = vst [vmem:[#allocation8 + $0x84] sm:$0xf] %v1389
      %1454 = vst [vmem:[#allocation8 + $0x88] sm:$0xf] %v1390
      %1455 = vst [vmem:[#allocation8 + $0x8c] sm:$0xf] %v1391
      %1456 = vst [vmem:[#allocation8 + $0x90] sm:$0xf] %v1392
      %1457 = vst [vmem:[#allocation8 + $0x94] sm:$0xf] %v1393
      %1458 = vst [vmem:[#allocation8 + $0x98] sm:$0xf] %v1394
      %1459 = vst [vmem:[#allocation8 + $0x9c] sm:$0xf] %v1395
      %1460 = vst [vmem:[#allocation8 + $0xa0] sm:$0xf] %v1396
      %1461 = vst [vmem:[#allocation8 + $0xa4] sm:$0xf] %v1397
      %1462 = vst [vmem:[#allocation8 + $0xa8] sm:$0xf] %v1398
      %1463 = vst [vmem:[#allocation8 + $0xac] sm:$0xf] %v1399
      %1464 = vst [vmem:[#allocation8 + $0xb0] sm:$0xf] %v1400
      %1465 = vst [vmem:[#allocation8 + $0xb4] sm:$0xf] %v1401
      %1466 = vst [vmem:[#allocation8 + $0xb8] sm:$0xf] %v1402
      %1467 = vst [vmem:[#allocation8 + $0xbc] sm:$0xf] %v1403
      %1468 = vst [vmem:[#allocation8 + $0xc0] sm:$0xf] %v1404
      %1469 = vst [vmem:[#allocation8 + $0xc4] sm:$0xf] %v1405
      %1470 = vst [vmem:[#allocation8 + $0xc8] sm:$0xf] %v1406
      %1471 = vst [vmem:[#allocation8 + $0xcc] sm:$0xf] %v1407
      %1472 = vst [vmem:[#allocation8 + $0xd0] sm:$0xf] %v1408
      %1473 = vst [vmem:[#allocation8 + $0xd4] sm:$0xf] %v1409
      %1474 = vst [vmem:[#allocation8 + $0xd8] sm:$0xf] %v1410
      %1475 = vst [vmem:[#allocation8 + $0xdc] sm:$0xf] %v1411
      %1476 = vst [vmem:[#allocation8 + $0xe0] sm:$0xf] %v1412
      %1477 = vst [vmem:[#allocation8 + $0xe4] sm:$0xf] %v1413
      %1478 = vst [vmem:[#allocation8 + $0xe8] sm:$0xf] %v1414
      %1479 = vst [vmem:[#allocation8 + $0xec] sm:$0xf] %v1415
      %1480 = vst [vmem:[#allocation8 + $0xf0] sm:$0xf] %v1416
      %1481 = vst [vmem:[#allocation8 + $0xf4] sm:$0xf] %v1417
      %1482 = vst [vmem:[#allocation8 + $0xf8] sm:$0xf] %v1418
      %1483 = vst [vmem:[#allocation8 + $0xfc] sm:$0xf] %v1419
    $region29: #{tpu_custom_call.1} parent=1 // pred_fallthru
      _
    // Predicated region
    $region30: #{tpu_custom_call.1} parent=1 // pred_check
      _
    $region31: #{tpu_custom_call.1} parent=1 // pred_check_branch
      %1485 = sbr.rel (0) target = $region33
    $region32: #{tpu_custom_call.1} parent=1 // pred_region
      %1487 = vsyncadd [#allocation5], 0
      %s1488 = sshll.u32 [#allocation8], 4
      %s1489 = int_to_ptr.vmem [resolvable:$true] %s1488
      %s1490 = sshll.u32 %s3, 4
      %s1491 = int_to_ptr.hbm [resolvable:$true] %s1490
      %1496 = dma.vmem_to_hbm [thread:$0]  %s1489, 4096, %s1491, [#allocation5], 64, 64, 4
    $region33: #{tpu_custom_call.1} parent=1 // pred_fallthru
      _
    // Predicated region
    $region34: #{tpu_custom_call.1} parent=1 // pred_check
      _
    $region35: #{tpu_custom_call.1} parent=1 // pred_check_branch
      %1498 = sbr.rel (0) target = $region37
    $region36: #{tpu_custom_call.1} parent=1 // pred_region
      %1500 = dma.done [#allocation5], 4096
    $region37: #{tpu_custom_call.1} parent=1 // pred_fallthru
      _
    %1501 = vsyncpa [#allocation4], 1
    %1502 = vsyncpa [#allocation7], 1
    %1503 = vsyncpa [#allocation5], 1

</llo_original>
